<compile_context>
chip_gen: v7x
topology: tpu7x:2x2x1
jax: 0.10.0
libtpu: 0.0.40
codegen_flags: <defaults>
</compile_context>

<pallas_src>
import jax
import jax.numpy as jnp
from jax.experimental import pallas as pl
from jax.experimental.pallas import tpu as pltpu

# ---------------------------------------------------------------------------
# Model dimensions (small, consistent with the module's forward)
# ---------------------------------------------------------------------------
B = 2            # batch
S = 8            # sequence length
H = 32           # hidden_size
F = 64           # FFN intermediate
VOCAB = 100
CLS_HID = 256    # classifier hidden (nn.Linear(hidden_size, 256))
NUM_EMOTIONS = 6
EPS = 1e-5
BS = B * S

# Lane-dense fused output slab: ONE full 128-lane tile, contiguous columns.
OUT_W = 128
RATING_LO, RATING_HI = 0, 1
SENT_LO, SENT_HI = 1, 4
EMO_LO, EMO_HI = 4, 4 + NUM_EMOTIONS            # cols 4..9   (sigmoid in-kernel)
ASPECT_LO, ASPECT_HI = 10, 15                    # cols 10..14
SUMM_LO, SUMM_HI = 15, 15 + H                    # cols 15..46


# ---------------------------------------------------------------------------
# Fused kernel: encoder layer + all multi-task heads, single program
# ---------------------------------------------------------------------------
def fused_model_kernel(x_ref, bias_ref, wqkvo_ref, vec_ref,
                       w1_ref, w2_ref, bh1_ref, hsmall_ref,
                       wh1_hbm, wh2_hbm,
                       out_ref,
                       wh1_vmem, wh2_vmem, dma_sem):
    f32 = jnp.float32
    bf16 = jnp.bfloat16

    # Kick off the two head-weight DMAs; they overlap the encoder compute.
    cp1 = pltpu.make_async_copy(wh1_hbm, wh1_vmem, dma_sem.at[0])
    cp2 = pltpu.make_async_copy(wh2_hbm, wh2_vmem, dma_sem.at[1])
    cp1.start()
    cp2.start()

    def layer_norm(v, gamma, beta):
        mu = jnp.mean(v, axis=-1, keepdims=True)
        var = jnp.mean((v - mu) ** 2, axis=-1, keepdims=True)
        return (v - mu) * jax.lax.rsqrt(var + EPS) * gamma + beta

    x = x_ref[...]                               # (B*S, H) flattened token embeddings

    # Packed small encoder vectors (rows: bq,bk,bv,bo,b1,b2,g1,lnb1,g2,lnb2)
    bq = vec_ref[0:1, 0:H]
    bk = vec_ref[1:2, 0:H]
    bv = vec_ref[2:3, 0:H]
    bo = vec_ref[3:4, 0:H]
    b1 = vec_ref[4:5, 0:F]
    b2 = vec_ref[5:6, 0:H]
    g1 = vec_ref[6:7, 0:H]
    lnb1 = vec_ref[7:8, 0:H]
    g2 = vec_ref[8:9, 0:H]
    lnb2 = vec_ref[9:10, 0:H]

    # --- self-attention (single head); 1/sqrt(H) folded into wq/bq ----------
    q = jnp.dot(x, wqkvo_ref[0], preferred_element_type=f32) + bq
    k = jnp.dot(x, wqkvo_ref[1], preferred_element_type=f32) + bk
    v = jnp.dot(x, wqkvo_ref[2], preferred_element_type=f32) + bv

    # Block-diagonal + key-padding additive bias precomputed in the wrapper.
    scores = jnp.dot(q, k.T, preferred_element_type=f32) + bias_ref[...]    # (BS,BS)
    scores = scores - jnp.max(scores, axis=-1, keepdims=True)
    p = jnp.exp(scores)
    p = p * pl.reciprocal(jnp.sum(p, axis=-1, keepdims=True), approx=True)
    attn = jnp.dot(p, v, preferred_element_type=f32)                        # (BS,H)

    attn = jnp.dot(attn, wqkvo_ref[3], preferred_element_type=f32) + bo
    h = layer_norm(x + attn, g1, lnb1)

    # --- feed-forward (bf16 weights on MXU, f32 accumulation/elementwise) ---
    ff = jnp.dot(h.astype(bf16), w1_ref[...], preferred_element_type=f32) + b1
    # TODO(synk): roberta uses erf-GELU; tanh approximation kept (EUP-friendly,
    # encoder is a synthetic stand-in anyway).
    ff = jax.nn.gelu(ff, approximate=True)
    ff = jnp.dot(ff.astype(bf16), w2_ref[...], preferred_element_type=f32) + b2
    seq = layer_norm(h + ff, g2, lnb2)           # (B*S, H) == sequence_output
    seq_bf = seq.astype(bf16)

    # --- heads: fused first layer [rating|sentiment|emotion|aspect] ---------
    cp1.wait()                                   # wh1 now resident in VMEM
    h_all = jnp.maximum(
        jnp.dot(seq_bf, wh1_vmem[...], preferred_element_type=f32) + bh1_ref[...],
        0.0)                                     # (B*S, 4*256)

    # --- fused second layers + summary projection -> one 128-lane slab ------
    cp2.wait()                                   # wh2 now resident in VMEM
    bh2 = hsmall_ref[0:1, :]                     # (1, OUT_W)
    wsum2 = hsmall_ref[1:1 + H, :]               # (H, OUT_W)
    raw = (jnp.dot(h_all.astype(bf16), wh2_vmem[...], preferred_element_type=f32)
           + jnp.dot(seq, wsum2, preferred_element_type=f32)
           + bh2)                                # (B*S, OUT_W)

    lane = jax.lax.broadcasted_iota(jnp.int32, raw.shape, 1)
    emo_lanes = (lane >= EMO_LO) & (lane < EMO_HI)
    out_ref[...] = jnp.where(emo_lanes, jax.nn.sigmoid(raw), raw)


def run_fused(x2, attn_bias, packed):
    wqkvo, enc_vecs, w1, w2, bh1, head_small, wh1, wh2 = packed
    args = (x2, attn_bias, wqkvo, enc_vecs, w1, w2, bh1, head_small, wh1, wh2)

    vmem = pl.BlockSpec(memory_space=pltpu.MemorySpace.VMEM)
    anyspec = pl.BlockSpec(memory_space=pl.ANY)          # manual DMA below
    in_specs = [vmem] * 8 + [anyspec, anyspec]

    flops = 2 * (BS * H * H * 4                 # qkv + output projection
                 + BS * BS * H * 2              # scores + attn*v
                 + BS * H * F * 2               # FFN
                 + BS * H * 4 * CLS_HID         # fused head layer 1
                 + BS * 4 * CLS_HID * OUT_W     # fused head layer 2
                 + BS * H * OUT_W)              # summary projection
    transcendentals = BS * BS + BS * F + BS * NUM_EMOTIONS
    bytes_accessed = (sum(int(a.size) * a.dtype.itemsize for a in args)
                      + BS * OUT_W * 4)

    return pl.pallas_call(
        fused_model_kernel,
        out_shape=jax.ShapeDtypeStruct((BS, OUT_W), jnp.float32),
        in_specs=in_specs,
        out_specs=vmem,
        scratch_shapes=[
            pltpu.VMEM((H, 4 * CLS_HID), jnp.bfloat16),   # wh1 landing buffer
            pltpu.VMEM((4 * CLS_HID, OUT_W), jnp.bfloat16),  # wh2 landing buffer
            pltpu.SemaphoreType.DMA((2,)),
        ],
        cost_estimate=pl.CostEstimate(flops=flops,
                                      transcendentals=transcendentals,
                                      bytes_accessed=bytes_accessed),
    )(*args)


# ---------------------------------------------------------------------------
# Parameter construction (deterministic) + one-time packing / head fusion
# ---------------------------------------------------------------------------
def dense(key, fan_in, fan_out):
    kw, kb = jax.random.split(key)
    scale = 1.0 / jnp.sqrt(jnp.float32(fan_in))
    w = jax.random.normal(kw, (fan_in, fan_out), jnp.float32) * scale
    b = jax.random.normal(kb, (1, fan_out), jnp.float32) * 0.01
    return w, b


def build_params(key):
    keys = jax.random.split(key, 24)
    ki = iter(keys)

    # embeddings (synthetic stand-in for roberta embedding layer)
    tok_emb = jax.random.normal(next(ki), (VOCAB, H), jnp.float32) * 0.02
    pos_emb = jax.random.normal(next(ki), (S, H), jnp.float32) * 0.02

    # encoder layer
    wq, bq = dense(next(ki), H, H)
    wk, bk = dense(next(ki), H, H)
    wv, bv = dense(next(ki), H, H)
    wo, bo = dense(next(ki), H, H)
    w1, b1 = dense(next(ki), H, F)
    w2, b2 = dense(next(ki), F, H)
    g1 = jnp.ones((1, H), jnp.float32)
    ln_b1 = jnp.zeros((1, H), jnp.float32)
    g2 = jnp.ones((1, H), jnp.float32)
    ln_b2 = jnp.zeros((1, H), jnp.float32)
    inv_sqrt_h = 1.0 / jnp.sqrt(jnp.float32(H))   # fold attention scale into q

    # pack qkv/out projection weights into one slab (one DMA)
    wqkvo = jnp.stack([wq * inv_sqrt_h, wk, wv, wo], axis=0)        # (4, H, H)

    # pack every small encoder vector into one lane-dense slab
    def padrow(v):
        return jnp.pad(v, ((0, 0), (0, F - v.shape[1])))
    enc_vecs = jnp.concatenate(
        [padrow(bq * inv_sqrt_h), padrow(bk), padrow(bv), padrow(bo),
         b1, padrow(b2), padrow(g1), padrow(ln_b1), padrow(g2), padrow(ln_b2),
         jnp.zeros((2, F), jnp.float32)], axis=0)                   # (12, 64)

    w1_bf = w1.astype(jnp.bfloat16)
    w2_bf = w2.astype(jnp.bfloat16)

    # heads (exact module structure)
    wr1, br1 = dense(next(ki), H, CLS_HID)
    wr2, br2 = dense(next(ki), CLS_HID, 1)
    ws1, bs1 = dense(next(ki), H, CLS_HID)
    ws2, bs2 = dense(next(ki), CLS_HID, 3)
    we1, be1 = dense(next(ki), H, CLS_HID)
    we2, be2 = dense(next(ki), CLS_HID, NUM_EMOTIONS)
    wa1, ba1 = dense(next(ki), H, CLS_HID)
    wa2, ba2 = dense(next(ki), CLS_HID, 5)
    wsum, bsum = dense(next(ki), H, H)

    # --- fuse head weights into lane-dense blocks (done once, XLA side) -----
    wh1 = jnp.concatenate([wr1, ws1, we1, wa1], axis=1).astype(jnp.bfloat16)  # (H, 1024)
    bh1 = jnp.concatenate([br1, bs1, be1, ba1], axis=1)                       # (1, 1024) f32

    wh2 = jnp.zeros((4 * CLS_HID, OUT_W), jnp.float32)
    wh2 = wh2.at[0:CLS_HID, RATING_LO:RATING_HI].set(wr2)
    wh2 = wh2.at[CLS_HID:2 * CLS_HID, SENT_LO:SENT_HI].set(ws2)
    wh2 = wh2.at[2 * CLS_HID:3 * CLS_HID, EMO_LO:EMO_HI].set(we2)
    wh2 = wh2.at[3 * CLS_HID:4 * CLS_HID, ASPECT_LO:ASPECT_HI].set(wa2)
    wh2 = wh2.astype(jnp.bfloat16)                                            # (1024, 128)

    bh2 = jnp.zeros((1, OUT_W), jnp.float32)
    bh2 = bh2.at[:, RATING_LO:RATING_HI].set(br2)
    bh2 = bh2.at[:, SENT_LO:SENT_HI].set(bs2)
    bh2 = bh2.at[:, EMO_LO:EMO_HI].set(be2)
    bh2 = bh2.at[:, ASPECT_LO:ASPECT_HI].set(ba2)
    bh2 = bh2.at[:, SUMM_LO:SUMM_HI].set(bsum)

    wsum2 = jnp.zeros((H, OUT_W), jnp.float32).at[:, SUMM_LO:SUMM_HI].set(wsum)
    head_small = jnp.concatenate([bh2, wsum2], axis=0)                        # (33, 128)

    packed = (wqkvo, enc_vecs, w1_bf, w2_bf, bh1, head_small, wh1, wh2)
    return tok_emb, pos_emb, packed


# ---------------------------------------------------------------------------
# Forward (task='all')
# ---------------------------------------------------------------------------
@jax.jit
def forward(input_ids, attention_mask, tok_emb, pos_emb, packed):
    # glue: embedding lookup + flatten to (B*S, H) outside the kernel
    x = tok_emb[input_ids] + pos_emb[None, :, :]               # (B, S, H)
    x2 = x.reshape(BS, H)

    # additive attention bias: block-diagonal over batches + key padding
    mask_f = attention_mask.astype(jnp.float32)                # (B, S)
    batch_id = jnp.repeat(jnp.arange(B, dtype=jnp.int32), S)   # (BS,)
    same_batch = batch_id[:, None] == batch_id[None, :]
    key_keep = mask_f.reshape(BS) > 0.5
    attn_bias = jnp.where(same_batch & key_keep[None, :], 0.0, -1e9)
    attn_bias = attn_bias.astype(jnp.float32)                  # (BS, BS)

    slab = run_fused(x2, attn_bias, packed)                    # (B*S, OUT_W)
    full = slab.reshape(B, S, OUT_W)
    pooled = full[:, 0, :]                                     # CLS-token columns

    return {
        "rating": pooled[:, RATING_LO:RATING_HI],              # (B, 1)
        "sentiment": pooled[:, SENT_LO:SENT_HI],               # (B, 3)
        "emotion": pooled[:, EMO_LO:EMO_HI],                   # (B, 6), sigmoid'ed
        "aspect": full[:, :, ASPECT_LO:ASPECT_HI],             # (B, S, 5)
        "summary_features": full[:, :, SUMM_LO:SUMM_HI],       # (B, S, H)
    }


if __name__ == "__main__":
    key = jax.random.PRNGKey(0)
    k_ids, k_params = jax.random.split(key)

    input_ids = jax.random.randint(k_ids, (B, S), 0, VOCAB, dtype=jnp.int32)
    attention_mask = jnp.ones((B, S), jnp.int32).at[1, S - 2:].set(0)

    tok_emb, pos_emb, packed = build_params(k_params)

    results = forward(input_ids, attention_mask, tok_emb, pos_emb, packed)
    jax.block_until_ready(results)

    assert results["rating"].shape == (B, 1)
    assert results["sentiment"].shape == (B, 3)
    assert results["emotion"].shape == (B, NUM_EMOTIONS)
    assert results["aspect"].shape == (B, S, 5)
    assert results["summary_features"].shape == (B, S, H)
    for v in results.values():
        assert bool(jnp.all(jnp.isfinite(v)))
    assert bool(jnp.all((results["emotion"] >= 0.0) & (results["emotion"] <= 1.0)))

    print("KERNEL_OK")
</pallas_src>

<mosaic_0001>
module attributes {stable_mosaic.version = 11 : i64} {
  func.func @fused_model_kernel(%arg0: memref<16x32xf32, #tpu.memory_space<vmem>>, %arg1: memref<16x16xf32, #tpu.memory_space<vmem>>, %arg2: memref<4x32x32xf32, #tpu.memory_space<vmem>>, %arg3: memref<12x64xf32, #tpu.memory_space<vmem>>, %arg4: memref<32x64xbf16, #tpu.memory_space<vmem>>, %arg5: memref<64x32xbf16, #tpu.memory_space<vmem>>, %arg6: memref<1x1024xf32, #tpu.memory_space<vmem>>, %arg7: memref<33x128xf32, #tpu.memory_space<vmem>>, %arg8: memref<32x1024xbf16, #tpu.memory_space<any>>, %arg9: memref<1024x128xbf16, #tpu.memory_space<any>>, %arg10: memref<16x128xf32, #tpu.memory_space<vmem>>, %arg11: memref<32x1024xbf16, #tpu.memory_space<vmem>>, %arg12: memref<1024x128xbf16, #tpu.memory_space<vmem>>, %arg13: memref<2x!tpu.dma_semaphore, #tpu.memory_space<semaphore_mem>>) attributes {dimension_semantics = [], scalar_prefetch = 0 : i64, scratch_operands = 3 : i64, tpu.core_type = #tpu.core_type<tc>} {
    %c0_i32 = arith.constant 0 : i32
    %0 = tpu.memref_slice %arg13[%c0_i32] : memref<2x!tpu.dma_semaphore, #tpu.memory_space<semaphore_mem>> -> memref<1x!tpu.dma_semaphore, #tpu.memory_space<semaphore_mem>>
    %1 = tpu.memref_squeeze %0 : memref<1x!tpu.dma_semaphore, #tpu.memory_space<semaphore_mem>> -> memref<!tpu.dma_semaphore, #tpu.memory_space<semaphore_mem>>
    tpu.enqueue_dma source(%arg8 : memref<32x1024xbf16, #tpu.memory_space<any>>) target(%arg11 : memref<32x1024xbf16, #tpu.memory_space<vmem>>) target_semaphore(%1 : memref<!tpu.dma_semaphore, #tpu.memory_space<semaphore_mem>>)
    %c1_i32 = arith.constant 1 : i32
    %2 = tpu.memref_slice %arg13[%c1_i32] : memref<2x!tpu.dma_semaphore, #tpu.memory_space<semaphore_mem>> -> memref<1x!tpu.dma_semaphore, #tpu.memory_space<semaphore_mem>>
    %3 = tpu.memref_squeeze %2 : memref<1x!tpu.dma_semaphore, #tpu.memory_space<semaphore_mem>> -> memref<!tpu.dma_semaphore, #tpu.memory_space<semaphore_mem>>
    tpu.enqueue_dma source(%arg9 : memref<1024x128xbf16, #tpu.memory_space<any>>) target(%arg12 : memref<1024x128xbf16, #tpu.memory_space<vmem>>) target_semaphore(%3 : memref<!tpu.dma_semaphore, #tpu.memory_space<semaphore_mem>>)
    %c0 = arith.constant 0 : index
    %c0_0 = arith.constant 0 : index
    %4 = vector.load %arg0[%c0, %c0_0] : memref<16x32xf32, #tpu.memory_space<vmem>>, vector<16x32xf32>
    %c0_1 = arith.constant 0 : index
    %c0_2 = arith.constant 0 : index
    %5 = vector.load %arg3[%c0_1, %c0_2] : memref<12x64xf32, #tpu.memory_space<vmem>>, vector<1x32xf32>
    %c1 = arith.constant 1 : index
    %c0_3 = arith.constant 0 : index
    %6 = vector.load %arg3[%c1, %c0_3] : memref<12x64xf32, #tpu.memory_space<vmem>>, vector<1x32xf32>
    %c2 = arith.constant 2 : index
    %c0_4 = arith.constant 0 : index
    %7 = vector.load %arg3[%c2, %c0_4] : memref<12x64xf32, #tpu.memory_space<vmem>>, vector<1x32xf32>
    %c3 = arith.constant 3 : index
    %c0_5 = arith.constant 0 : index
    %8 = vector.load %arg3[%c3, %c0_5] : memref<12x64xf32, #tpu.memory_space<vmem>>, vector<1x32xf32>
    %c4 = arith.constant 4 : index
    %c0_6 = arith.constant 0 : index
    %9 = vector.load %arg3[%c4, %c0_6] : memref<12x64xf32, #tpu.memory_space<vmem>>, vector<1x64xf32>
    %c5 = arith.constant 5 : index
    %c0_7 = arith.constant 0 : index
    %10 = vector.load %arg3[%c5, %c0_7] : memref<12x64xf32, #tpu.memory_space<vmem>>, vector<1x32xf32>
    %c6 = arith.constant 6 : index
    %c0_8 = arith.constant 0 : index
    %11 = vector.load %arg3[%c6, %c0_8] : memref<12x64xf32, #tpu.memory_space<vmem>>, vector<1x32xf32>
    %c7 = arith.constant 7 : index
    %c0_9 = arith.constant 0 : index
    %12 = vector.load %arg3[%c7, %c0_9] : memref<12x64xf32, #tpu.memory_space<vmem>>, vector<1x32xf32>
    %c8 = arith.constant 8 : index
    %c0_10 = arith.constant 0 : index
    %13 = vector.load %arg3[%c8, %c0_10] : memref<12x64xf32, #tpu.memory_space<vmem>>, vector<1x32xf32>
    %c9 = arith.constant 9 : index
    %c0_11 = arith.constant 0 : index
    %14 = vector.load %arg3[%c9, %c0_11] : memref<12x64xf32, #tpu.memory_space<vmem>>, vector<1x32xf32>
    %c0_12 = arith.constant 0 : index
    %c0_13 = arith.constant 0 : index
    %c0_14 = arith.constant 0 : index
    %15 = vector.load %arg2[%c0_12, %c0_13, %c0_14] : memref<4x32x32xf32, #tpu.memory_space<vmem>>, vector<1x32x32xf32>
    %16 = vector.shape_cast %15 : vector<1x32x32xf32> to vector<32x32xf32>
    %cst = arith.constant dense<0.000000e+00> : vector<16x32xf32>
    %17 = tpu.matmul %4, %16, %cst {dimension_numbers = #tpu.dot_dimension_numbers<[1], [0], [0], [1], [0, 0, 1, 1], [], []>} : vector<16x32xf32>, vector<32x32xf32>, vector<16x32xf32> -> vector<16x32xf32>
    %18 = vector.broadcast %5 : vector<1x32xf32> to vector<16x32xf32>
    %19 = arith.addf %17, %18 : vector<16x32xf32>
    %c1_15 = arith.constant 1 : index
    %c0_16 = arith.constant 0 : index
    %c0_17 = arith.constant 0 : index
    %20 = vector.load %arg2[%c1_15, %c0_16, %c0_17] : memref<4x32x32xf32, #tpu.memory_space<vmem>>, vector<1x32x32xf32>
    %21 = vector.shape_cast %20 : vector<1x32x32xf32> to vector<32x32xf32>
    %cst_18 = arith.constant dense<0.000000e+00> : vector<16x32xf32>
    %22 = tpu.matmul %4, %21, %cst_18 {dimension_numbers = #tpu.dot_dimension_numbers<[1], [0], [0], [1], [0, 0, 1, 1], [], []>} : vector<16x32xf32>, vector<32x32xf32>, vector<16x32xf32> -> vector<16x32xf32>
    %23 = vector.broadcast %6 : vector<1x32xf32> to vector<16x32xf32>
    %24 = arith.addf %22, %23 : vector<16x32xf32>
    %c2_19 = arith.constant 2 : index
    %c0_20 = arith.constant 0 : index
    %c0_21 = arith.constant 0 : index
    %25 = vector.load %arg2[%c2_19, %c0_20, %c0_21] : memref<4x32x32xf32, #tpu.memory_space<vmem>>, vector<1x32x32xf32>
    %26 = vector.shape_cast %25 : vector<1x32x32xf32> to vector<32x32xf32>
    %cst_22 = arith.constant dense<0.000000e+00> : vector<16x32xf32>
    %27 = tpu.matmul %4, %26, %cst_22 {dimension_numbers = #tpu.dot_dimension_numbers<[1], [0], [0], [1], [0, 0, 1, 1], [], []>} : vector<16x32xf32>, vector<32x32xf32>, vector<16x32xf32> -> vector<16x32xf32>
    %28 = vector.broadcast %7 : vector<1x32xf32> to vector<16x32xf32>
    %29 = arith.addf %27, %28 : vector<16x32xf32>
    %30 = tpu.transpose %24, [1, 0] : vector<16x32xf32> -> vector<32x16xf32>
    %cst_23 = arith.constant dense<0.000000e+00> : vector<16x16xf32>
    %31 = tpu.matmul %19, %30, %cst_23 {dimension_numbers = #tpu.dot_dimension_numbers<[1], [0], [0], [1], [0, 0, 1, 1], [], []>} : vector<16x32xf32>, vector<32x16xf32>, vector<16x16xf32> -> vector<16x16xf32>
    %c0_24 = arith.constant 0 : index
    %c0_25 = arith.constant 0 : index
    %32 = vector.load %arg1[%c0_24, %c0_25] : memref<16x16xf32, #tpu.memory_space<vmem>>, vector<16x16xf32>
    %33 = arith.addf %31, %32 : vector<16x16xf32>
    %cst_26 = arith.constant dense<0xFF800000> : vector<16xf32>
    %34 = vector.multi_reduction <maximumf>, %33, %cst_26 [1] : vector<16x16xf32> to vector<16xf32>
    %35 = vector.shape_cast %34 : vector<16xf32> to vector<16x1xf32>
    %36 = vector.broadcast %35 : vector<16x1xf32> to vector<16x16xf32>
    %37 = arith.subf %33, %36 : vector<16x16xf32>
    %38 = math.exp %37 : vector<16x16xf32>
    %cst_27 = arith.constant dense<0.000000e+00> : vector<16xf32>
    %39 = vector.multi_reduction <add>, %38, %cst_27 [1] : vector<16x16xf32> to vector<16xf32>
    %40 = vector.shape_cast %39 : vector<16xf32> to vector<16x1xf32>
    %41 = tpu.reciprocal %40 {approx = true} : vector<16x1xf32> -> vector<16x1xf32>
    %42 = vector.broadcast %41 : vector<16x1xf32> to vector<16x16xf32>
    %43 = arith.mulf %38, %42 : vector<16x16xf32>
    %cst_28 = arith.constant dense<0.000000e+00> : vector<16x32xf32>
    %44 = tpu.matmul %43, %29, %cst_28 {dimension_numbers = #tpu.dot_dimension_numbers<[1], [0], [0], [1], [0, 0, 1, 1], [], []>} : vector<16x16xf32>, vector<16x32xf32>, vector<16x32xf32> -> vector<16x32xf32>
    %c3_29 = arith.constant 3 : index
    %c0_30 = arith.constant 0 : index
    %c0_31 = arith.constant 0 : index
    %45 = vector.load %arg2[%c3_29, %c0_30, %c0_31] : memref<4x32x32xf32, #tpu.memory_space<vmem>>, vector<1x32x32xf32>
    %46 = vector.shape_cast %45 : vector<1x32x32xf32> to vector<32x32xf32>
    %cst_32 = arith.constant dense<0.000000e+00> : vector<16x32xf32>
    %47 = tpu.matmul %44, %46, %cst_32 {dimension_numbers = #tpu.dot_dimension_numbers<[1], [0], [0], [1], [0, 0, 1, 1], [], []>} : vector<16x32xf32>, vector<32x32xf32>, vector<16x32xf32> -> vector<16x32xf32>
    %48 = vector.broadcast %8 : vector<1x32xf32> to vector<16x32xf32>
    %49 = arith.addf %47, %48 : vector<16x32xf32>
    %50 = arith.addf %4, %49 : vector<16x32xf32>
    %cst_33 = arith.constant dense<0.000000e+00> : vector<16xf32>
    %51 = vector.multi_reduction <add>, %50, %cst_33 [1] : vector<16x32xf32> to vector<16xf32>
    %52 = vector.shape_cast %51 : vector<16xf32> to vector<16x1xf32>
    %cst_34 = arith.constant 3.200000e+01 : f32
    %53 = vector.broadcast %cst_34 : f32 to vector<16x1xf32>
    %54 = arith.divf %52, %53 : vector<16x1xf32>
    %55 = vector.broadcast %54 : vector<16x1xf32> to vector<16x32xf32>
    %56 = arith.subf %50, %55 : vector<16x32xf32>
    %57 = arith.mulf %56, %56 : vector<16x32xf32>
    %cst_35 = arith.constant dense<0.000000e+00> : vector<16xf32>
    %58 = vector.multi_reduction <add>, %57, %cst_35 [1] : vector<16x32xf32> to vector<16xf32>
    %59 = vector.shape_cast %58 : vector<16xf32> to vector<16x1xf32>
    %cst_36 = arith.constant 3.200000e+01 : f32
    %60 = vector.broadcast %cst_36 : f32 to vector<16x1xf32>
    %61 = arith.divf %59, %60 : vector<16x1xf32>
    %62 = vector.broadcast %54 : vector<16x1xf32> to vector<16x32xf32>
    %63 = arith.subf %50, %62 : vector<16x32xf32>
    %cst_37 = arith.constant 9.99999974E-6 : f32
    %64 = vector.broadcast %cst_37 : f32 to vector<16x1xf32>
    %65 = arith.addf %61, %64 : vector<16x1xf32>
    %66 = math.rsqrt %65 : vector<16x1xf32>
    %67 = vector.broadcast %66 : vector<16x1xf32> to vector<16x32xf32>
    %68 = arith.mulf %63, %67 : vector<16x32xf32>
    %69 = vector.broadcast %11 : vector<1x32xf32> to vector<16x32xf32>
    %70 = arith.mulf %68, %69 : vector<16x32xf32>
    %71 = vector.broadcast %12 : vector<1x32xf32> to vector<16x32xf32>
    %72 = arith.addf %70, %71 : vector<16x32xf32>
    %73 = arith.truncf %72 : vector<16x32xf32> to vector<16x32xbf16>
    %c0_38 = arith.constant 0 : index
    %c0_39 = arith.constant 0 : index
    %74 = vector.load %arg4[%c0_38, %c0_39] : memref<32x64xbf16, #tpu.memory_space<vmem>>, vector<32x64xbf16>
    %cst_40 = arith.constant dense<0.000000e+00> : vector<16x64xf32>
    %75 = tpu.matmul %73, %74, %cst_40 {dimension_numbers = #tpu.dot_dimension_numbers<[1], [0], [0], [1], [0, 0, 1, 1], [], []>} : vector<16x32xbf16>, vector<32x64xbf16>, vector<16x64xf32> -> vector<16x64xf32>
    %76 = vector.broadcast %9 : vector<1x64xf32> to vector<16x64xf32>
    %77 = arith.addf %75, %76 : vector<16x64xf32>
    %78 = arith.mulf %77, %77 : vector<16x64xf32>
    %79 = arith.mulf %77, %78 : vector<16x64xf32>
    %cst_41 = arith.constant 4.471500e-02 : f32
    %80 = vector.broadcast %cst_41 : f32 to vector<16x64xf32>
    %81 = arith.mulf %80, %79 : vector<16x64xf32>
    %82 = arith.addf %77, %81 : vector<16x64xf32>
    %cst_42 = arith.constant 0.797884583 : f32
    %83 = vector.broadcast %cst_42 : f32 to vector<16x64xf32>
    %84 = arith.mulf %83, %82 : vector<16x64xf32>
    %85 = math.tanh %84 : vector<16x64xf32>
    %cst_43 = arith.constant 1.000000e+00 : f32
    %86 = vector.broadcast %cst_43 : f32 to vector<16x64xf32>
    %87 = arith.addf %86, %85 : vector<16x64xf32>
    %cst_44 = arith.constant 5.000000e-01 : f32
    %88 = vector.broadcast %cst_44 : f32 to vector<16x64xf32>
    %89 = arith.mulf %88, %87 : vector<16x64xf32>
    %90 = arith.mulf %77, %89 : vector<16x64xf32>
    %91 = arith.truncf %90 : vector<16x64xf32> to vector<16x64xbf16>
    %c0_45 = arith.constant 0 : index
    %c0_46 = arith.constant 0 : index
    %92 = vector.load %arg5[%c0_45, %c0_46] : memref<64x32xbf16, #tpu.memory_space<vmem>>, vector<64x32xbf16>
    %cst_47 = arith.constant dense<0.000000e+00> : vector<16x32xf32>
    %93 = tpu.matmul %91, %92, %cst_47 {dimension_numbers = #tpu.dot_dimension_numbers<[1], [0], [0], [1], [0, 0, 1, 1], [], []>} : vector<16x64xbf16>, vector<64x32xbf16>, vector<16x32xf32> -> vector<16x32xf32>
    %94 = vector.broadcast %10 : vector<1x32xf32> to vector<16x32xf32>
    %95 = arith.addf %93, %94 : vector<16x32xf32>
    %96 = arith.addf %72, %95 : vector<16x32xf32>
    %cst_48 = arith.constant dense<0.000000e+00> : vector<16xf32>
    %97 = vector.multi_reduction <add>, %96, %cst_48 [1] : vector<16x32xf32> to vector<16xf32>
    %98 = vector.shape_cast %97 : vector<16xf32> to vector<16x1xf32>
    %cst_49 = arith.constant 3.200000e+01 : f32
    %99 = vector.broadcast %cst_49 : f32 to vector<16x1xf32>
    %100 = arith.divf %98, %99 : vector<16x1xf32>
    %101 = vector.broadcast %100 : vector<16x1xf32> to vector<16x32xf32>
    %102 = arith.subf %96, %101 : vector<16x32xf32>
    %103 = arith.mulf %102, %102 : vector<16x32xf32>
    %cst_50 = arith.constant dense<0.000000e+00> : vector<16xf32>
    %104 = vector.multi_reduction <add>, %103, %cst_50 [1] : vector<16x32xf32> to vector<16xf32>
    %105 = vector.shape_cast %104 : vector<16xf32> to vector<16x1xf32>
    %cst_51 = arith.constant 3.200000e+01 : f32
    %106 = vector.broadcast %cst_51 : f32 to vector<16x1xf32>
    %107 = arith.divf %105, %106 : vector<16x1xf32>
    %108 = vector.broadcast %100 : vector<16x1xf32> to vector<16x32xf32>
    %109 = arith.subf %96, %108 : vector<16x32xf32>
    %cst_52 = arith.constant 9.99999974E-6 : f32
    %110 = vector.broadcast %cst_52 : f32 to vector<16x1xf32>
    %111 = arith.addf %107, %110 : vector<16x1xf32>
    %112 = math.rsqrt %111 : vector<16x1xf32>
    %113 = vector.broadcast %112 : vector<16x1xf32> to vector<16x32xf32>
    %114 = arith.mulf %109, %113 : vector<16x32xf32>
    %115 = vector.broadcast %13 : vector<1x32xf32> to vector<16x32xf32>
    %116 = arith.mulf %114, %115 : vector<16x32xf32>
    %117 = vector.broadcast %14 : vector<1x32xf32> to vector<16x32xf32>
    %118 = arith.addf %116, %117 : vector<16x32xf32>
    %119 = arith.truncf %118 : vector<16x32xf32> to vector<16x32xbf16>
    %c0_i32_53 = arith.constant 0 : i32
    %120 = tpu.memref_slice %arg13[%c0_i32_53] : memref<2x!tpu.dma_semaphore, #tpu.memory_space<semaphore_mem>> -> memref<1x!tpu.dma_semaphore, #tpu.memory_space<semaphore_mem>>
    %121 = tpu.memref_squeeze %120 : memref<1x!tpu.dma_semaphore, #tpu.memory_space<semaphore_mem>> -> memref<!tpu.dma_semaphore, #tpu.memory_space<semaphore_mem>>
    tpu.wait_dma2 semaphore(%121 : memref<!tpu.dma_semaphore, #tpu.memory_space<semaphore_mem>>) src(%arg8 : memref<32x1024xbf16, #tpu.memory_space<any>>) dst(%arg11 : memref<32x1024xbf16, #tpu.memory_space<vmem>>)
    %c0_54 = arith.constant 0 : index
    %c0_55 = arith.constant 0 : index
    %122 = vector.load %arg11[%c0_54, %c0_55] : memref<32x1024xbf16, #tpu.memory_space<vmem>>, vector<32x1024xbf16>
    %cst_56 = arith.constant dense<0.000000e+00> : vector<16x1024xf32>
    %123 = tpu.matmul %119, %122, %cst_56 {dimension_numbers = #tpu.dot_dimension_numbers<[1], [0], [0], [1], [0, 0, 1, 1], [], []>} : vector<16x32xbf16>, vector<32x1024xbf16>, vector<16x1024xf32> -> vector<16x1024xf32>
    %c0_57 = arith.constant 0 : index
    %c0_58 = arith.constant 0 : index
    %124 = vector.load %arg6[%c0_57, %c0_58] : memref<1x1024xf32, #tpu.memory_space<vmem>>, vector<1x1024xf32>
    %125 = vector.broadcast %124 : vector<1x1024xf32> to vector<16x1024xf32>
    %126 = arith.addf %123, %125 : vector<16x1024xf32>
    %cst_59 = arith.constant 0.000000e+00 : f32
    %127 = vector.broadcast %cst_59 : f32 to vector<16x1024xf32>
    %128 = arith.maximumf %126, %127 : vector<16x1024xf32>
    %c1_i32_60 = arith.constant 1 : i32
    %129 = tpu.memref_slice %arg13[%c1_i32_60] : memref<2x!tpu.dma_semaphore, #tpu.memory_space<semaphore_mem>> -> memref<1x!tpu.dma_semaphore, #tpu.memory_space<semaphore_mem>>
    %130 = tpu.memref_squeeze %129 : memref<1x!tpu.dma_semaphore, #tpu.memory_space<semaphore_mem>> -> memref<!tpu.dma_semaphore, #tpu.memory_space<semaphore_mem>>
    tpu.wait_dma2 semaphore(%130 : memref<!tpu.dma_semaphore, #tpu.memory_space<semaphore_mem>>) src(%arg9 : memref<1024x128xbf16, #tpu.memory_space<any>>) dst(%arg12 : memref<1024x128xbf16, #tpu.memory_space<vmem>>)
    %c0_61 = arith.constant 0 : index
    %c0_62 = arith.constant 0 : index
    %131 = vector.load %arg7[%c0_61, %c0_62] : memref<33x128xf32, #tpu.memory_space<vmem>>, vector<1x128xf32>
    %c1_63 = arith.constant 1 : index
    %c0_64 = arith.constant 0 : index
    %132 = vector.load %arg7[%c1_63, %c0_64] : memref<33x128xf32, #tpu.memory_space<vmem>>, vector<32x128xf32>
    %133 = arith.truncf %128 : vector<16x1024xf32> to vector<16x1024xbf16>
    %c0_65 = arith.constant 0 : index
    %c0_66 = arith.constant 0 : index
    %134 = vector.load %arg12[%c0_65, %c0_66] : memref<1024x128xbf16, #tpu.memory_space<vmem>>, vector<1024x128xbf16>
    %cst_67 = arith.constant dense<0.000000e+00> : vector<16x128xf32>
    %135 = tpu.matmul %133, %134, %cst_67 {dimension_numbers = #tpu.dot_dimension_numbers<[1], [0], [0], [1], [0, 0, 1, 1], [], []>} : vector<16x1024xbf16>, vector<1024x128xbf16>, vector<16x128xf32> -> vector<16x128xf32>
    %cst_68 = arith.constant dense<0.000000e+00> : vector<16x128xf32>
    %136 = tpu.matmul %118, %132, %cst_68 {dimension_numbers = #tpu.dot_dimension_numbers<[1], [0], [0], [1], [0, 0, 1, 1], [], []>} : vector<16x32xf32>, vector<32x128xf32>, vector<16x128xf32> -> vector<16x128xf32>
    %137 = arith.addf %135, %136 : vector<16x128xf32>
    %138 = vector.broadcast %131 : vector<1x128xf32> to vector<16x128xf32>
    %139 = arith.addf %137, %138 : vector<16x128xf32>
    %140 = tpu.iota {dimensions = array<i32: 1>} : vector<16x128xi32>
    %c4_i32 = arith.constant 4 : i32
    %141 = vector.broadcast %c4_i32 : i32 to vector<16x128xi32>
    %142 = arith.cmpi sge, %140, %141 : vector<16x128xi32>
    %c10_i32 = arith.constant 10 : i32
    %143 = vector.broadcast %c10_i32 : i32 to vector<16x128xi32>
    %144 = arith.cmpi slt, %140, %143 : vector<16x128xi32>
    %145 = arith.andi %142, %144 : vector<16x128xi1>
    %146 = arith.negf %139 : vector<16x128xf32>
    %147 = math.exp %146 : vector<16x128xf32>
    %cst_69 = arith.constant 1.000000e+00 : f32
    %148 = vector.broadcast %cst_69 : f32 to vector<16x128xf32>
    %149 = arith.addf %148, %147 : vector<16x128xf32>
    %150 = arith.divf %148, %149 : vector<16x128xf32>
    %151 = arith.select %145, %150, %139 : vector<16x128xi1>, vector<16x128xf32>
    %c0_70 = arith.constant 0 : index
    %c0_71 = arith.constant 0 : index
    %152 = vector.load %arg10[%c0_70, %c0_71] : memref<16x128xf32, #tpu.memory_space<vmem>>, vector<16x128xf32>
    tpu.vector_store %arg10[%c0_70, %c0_71], %151 {strides = array<i32>} : memref<16x128xf32, #tpu.memory_space<vmem>>, vector<16x128xf32>,
    return
  }
}

</mosaic_0001>

<llo_original>
// kernel: forward.1
$region0: #{forward.1}
  #allocation0 [shape = 'u32[]', space=smem, size = 0x4, offset = 0x4, fixed_abs, tag = 'smem constant byte address 0x4 - core index']
  #allocation1 [shape = 'u32[144,128]{1,0:T(1,128)}', space=vmem, size = 0x12000, scoped, tag = 'internal scratch']
  #allocation2 [shape = 'bf16[32,1024]{1,0:T(16,128)(2,1)}', space=vmem, size = 0x10000, scoped, tag = 'scratch operand']
  #allocation3 [shape = 'bf16[1024,128]{1,0:T(16,128)(2,1)}', space=vmem, size = 0x40000, scoped, tag = 'scratch operand']
  #allocation4 [shape = 's32[2]{0}', space=sflag, size = 0x8, scoped, tag = 'scratch operand']
  #allocation5 [shape = 's32[]', space=sflag, size = 0x4, offset = 0, fixed_abs, tag = 'sflag constant byte address 0x0 - dummy sync flag']
  #allocation6 [shape = 's32[]', space=sflag, size = 0x4, offset = 0, fixed_abs, tag = 'sflag constant byte address 0x0 - dummy sync flag']
  #allocation7 [shape = 's32[]', space=sflag, size = 0x4, offset = 0, fixed_abs, tag = 'sflag constant byte address 0x0 - dummy sync flag']
  #allocation8 [shape = 'u32[]', space=smem, size = 0x4, offset = 0x44, fixed_abs, tag = 'smem constant byte address 0x44 - assertion arg 0']
  #allocation9 [shape = 'u32[]', space=smem, size = 0x4, offset = 0x48, fixed_abs, tag = 'smem constant byte address 0x48 - assertion arg 1']
  %s0 = inlined_call_operand.vmem [shape: f32[16,32], index: 0, kind: input, shape index: {}]
  %s1 = inlined_call_operand.vmem [shape: f32[16,16], index: 1, kind: input, shape index: {}]
  %s2 = inlined_call_operand.vmem [shape: f32[4,32,32], index: 2, kind: input, shape index: {}]
  %s3 = inlined_call_operand.vmem [shape: f32[12,64], index: 3, kind: input, shape index: {}]
  %s4 = inlined_call_operand.vmem [shape: bf16[32,64], index: 4, kind: input, shape index: {}]
  %s5 = inlined_call_operand.vmem [shape: bf16[64,32], index: 5, kind: input, shape index: {}]
  %s6 = inlined_call_operand.vmem [shape: f32[1,1024], index: 6, kind: input, shape index: {}]
  %s7 = inlined_call_operand.vmem [shape: f32[33,128], index: 7, kind: input, shape index: {}]
  %s8 = inlined_call_operand.vmem [shape: bf16[32,1024], index: 8, kind: input, shape index: {}]
  %s9 = inlined_call_operand.hbm [shape: bf16[1024,128], index: 9, kind: input, shape index: {}]
  %s10 = inlined_call_operand.vmem [shape: f32[16,128], index: 10, kind: output, shape index: {}]
  %s11 = sld [smem:[#allocation0]]
  $region83: #{forward.1} parent=0
    _
  %s13 = ssub.s32 1, %s11
  %s14 = scalar_select 0, %s13, %s11
  // Predicated region
  $region2: #{forward.1} parent=0 // pred_check
    _
  $region3: #{forward.1} parent=0 // pred_check_branch
    %16 = sbr.rel (0) target = $region5
  $region4: #{forward.1} parent=0 // pred_region
    _
  $region5: #{forward.1} parent=0 // pred_fallthru
    _
  // Predicated region
  $region6: #{forward.1} parent=0 // pred_check
    _
  $region7: #{forward.1} parent=0 // pred_check_branch
    %18 = sbr.rel (0) target = $region9
  $region8: #{forward.1} parent=0 // pred_region
    _
  $region9: #{forward.1} parent=0 // pred_fallthru
    _
  // Predicated region
  $region10: #{forward.1} parent=0 // pred_check
    _
  $region11: #{forward.1} parent=0 // pred_check_branch
    %20 = sbr.rel (0) target = $region13
  $region12: #{forward.1} parent=0 // pred_region
    _
  $region13: #{forward.1} parent=0 // pred_fallthru
    _
  // Predicated region
  $region14: #{forward.1} parent=0 // pred_check
    _
  $region15: #{forward.1} parent=0 // pred_check_branch
    %22 = sbr.rel (0) target = $region17
  $region16: #{forward.1} parent=0 // pred_region
    _
  $region17: #{forward.1} parent=0 // pred_fallthru
    _
  // Predicated region
  $region18: #{forward.1} parent=0 // pred_check
    _
  $region19: #{forward.1} parent=0 // pred_check_branch
    %24 = sbr.rel (0) target = $region21
  $region20: #{forward.1} parent=0 // pred_region
    _
  $region21: #{forward.1} parent=0 // pred_fallthru
    _
  // Predicated region
  $region22: #{forward.1} parent=0 // pred_check
    _
  $region23: #{forward.1} parent=0 // pred_check_branch
    %26 = sbr.rel (0) target = $region25
  $region24: #{forward.1} parent=0 // pred_region
    _
  $region25: #{forward.1} parent=0 // pred_fallthru
    _
  // Predicated region
  $region26: #{forward.1} parent=0 // pred_check
    _
  $region27: #{forward.1} parent=0 // pred_check_branch
    %28 = sbr.rel (0) target = $region29
  $region28: #{forward.1} parent=0 // pred_region
    _
  $region29: #{forward.1} parent=0 // pred_fallthru
    _
  // Predicated region
  $region30: #{forward.1} parent=0 // pred_check
    _
  $region31: #{forward.1} parent=0 // pred_check_branch
    %30 = sbr.rel (0) target = $region33
  $region32: #{forward.1} parent=0 // pred_region
    _
  $region33: #{forward.1} parent=0 // pred_fallthru
    _
  %p33 = scmp.lt.u32.totalorder 4, 8
  %p34 = pneg %p33
  // Predicated region
  $region34: #{forward.1} parent=0 // pred_check
    _
  $region35: #{forward.1} parent=0 // pred_check_branch
    %36 = sbr.rel (%p33) target = $region37
  $region36: #{forward.1} parent=0 // pred_region
    %s113 = sand.u32 4, 7
    %p114 = scmp.eq.s32.totalorder %s113, 0
    %p115 = pneg %p114
    // Predicated region
    $region49: #{forward.1} parent=36 // pred_check
      _
    $region50: #{forward.1} parent=36 // pred_check_branch
      %117 = sbr.rel (%p114) target = $region52
    $region51: #{forward.1} parent=36 // pred_region
      %s118 = sand.u32 4, 7
      %s119 = ssub.s32 4, %s118
      %s120 = scalar_lea.vmem %s8, %s119
      %s121 = ssub.s32 4, %s118
      %s122 = scalar_lea.vmem [#allocation2], %s121
      loop: start=0, step=1, limit=1
      $region53: #{forward.1} parent=51 // loop_pre_header
        _
      $region54: #{forward.1} parent=51 // loop_header
        %s124 = sphi 0, %s128
        %p125 = scmp.ge.s32.totalorder %s124, 1
        %s129 = sphi %s8, %s8
        %s130 = sphi [#allocation2], [#allocation2]
      $region55: #{forward.1} parent=51 // loop_header_branch
        %127 = sbr.rel (%p125) target = $region59
      $region56: #{forward.1} parent=51 // loop_body
        _
      $region57: #{forward.1} parent=51 // loop_footer
        %s128 = sadd.s32 1, %s124
      $region58: #{forward.1} parent=51 // loop_footer_branch
        %123 = sbr.rel target = $region54
      $region59: #{forward.1} parent=51 // loop_exit
        _
      %s131 = sshllo.u32 0, %s118
      loop: start=0, step=1, limit=1
      $region60: #{forward.1} parent=51 // loop_pre_header
        _
      $region61: #{forward.1} parent=51 // loop_header
        %s133 = sphi 0, %s137
        %p134 = scmp.ge.s32.totalorder %s133, 1
        %s138 = sphi %s120, %s120
        %s139 = sphi %s122, %s122
      $region62: #{forward.1} parent=51 // loop_header_branch
        %136 = sbr.rel (%p134) target = $region66
      $region63: #{forward.1} parent=51 // loop_body
        %v140 = vld [vmem:[%s138] sm:%s131]
        %141 = vst [vmem:[%s139] sm:%s131] %v140
        %v142 = vld [vmem:[%s138 + $0x20] sm:%s131]
        %143 = vst [vmem:[%s139 + $0x4] sm:%s131] %v142
        %v144 = vld [vmem:[%s138 + $0x4] sm:%s131]
        %145 = vst [vmem:[%s139 + $0x8] sm:%s131] %v144
        %v146 = vld [vmem:[%s138 + $0x24] sm:%s131]
        %147 = vst [vmem:[%s139 + $0xc] sm:%s131] %v146
        %v148 = vld [vmem:[%s138 + $0x8] sm:%s131]
        %149 = vst [vmem:[%s139 + $0x10] sm:%s131] %v148
        %v150 = vld [vmem:[%s138 + $0x28] sm:%s131]
        %151 = vst [vmem:[%s139 + $0x14] sm:%s131] %v150
        %v152 = vld [vmem:[%s138 + $0xc] sm:%s131]
        %153 = vst [vmem:[%s139 + $0x18] sm:%s131] %v152
        %v154 = vld [vmem:[%s138 + $0x2c] sm:%s131]
        %155 = vst [vmem:[%s139 + $0x1c] sm:%s131] %v154
        %v156 = vld [vmem:[%s138 + $0x10] sm:%s131]
        %157 = vst [vmem:[%s139 + $0x20] sm:%s131] %v156
        %v158 = vld [vmem:[%s138 + $0x30] sm:%s131]
        %159 = vst [vmem:[%s139 + $0x24] sm:%s131] %v158
        %v160 = vld [vmem:[%s138 + $0x14] sm:%s131]
        %161 = vst [vmem:[%s139 + $0x28] sm:%s131] %v160
        %v162 = vld [vmem:[%s138 + $0x34] sm:%s131]
        %163 = vst [vmem:[%s139 + $0x2c] sm:%s131] %v162
        %v164 = vld [vmem:[%s138 + $0x18] sm:%s131]
        %165 = vst [vmem:[%s139 + $0x30] sm:%s131] %v164
        %v166 = vld [vmem:[%s138 + $0x38] sm:%s131]
        %167 = vst [vmem:[%s139 + $0x34] sm:%s131] %v166
        %v168 = vld [vmem:[%s138 + $0x1c] sm:%s131]
        %169 = vst [vmem:[%s139 + $0x38] sm:%s131] %v168
        %v170 = vld [vmem:[%s138 + $0x3c] sm:%s131]
        %171 = vst [vmem:[%s139 + $0x3c] sm:%s131] %v170
        %v172 = vld [vmem:[%s138 + $0x40] sm:%s131]
        %173 = vst [vmem:[%s139 + $0x40] sm:%s131] %v172
        %v174 = vld [vmem:[%s138 + $0x60] sm:%s131]
        %175 = vst [vmem:[%s139 + $0x44] sm:%s131] %v174
        %v176 = vld [vmem:[%s138 + $0x44] sm:%s131]
        %177 = vst [vmem:[%s139 + $0x48] sm:%s131] %v176
        %v178 = vld [vmem:[%s138 + $0x64] sm:%s131]
        %179 = vst [vmem:[%s139 + $0x4c] sm:%s131] %v178
        %v180 = vld [vmem:[%s138 + $0x48] sm:%s131]
        %181 = vst [vmem:[%s139 + $0x50] sm:%s131] %v180
        %v182 = vld [vmem:[%s138 + $0x68] sm:%s131]
        %183 = vst [vmem:[%s139 + $0x54] sm:%s131] %v182
        %v184 = vld [vmem:[%s138 + $0x4c] sm:%s131]
        %185 = vst [vmem:[%s139 + $0x58] sm:%s131] %v184
        %v186 = vld [vmem:[%s138 + $0x6c] sm:%s131]
        %187 = vst [vmem:[%s139 + $0x5c] sm:%s131] %v186
        %v188 = vld [vmem:[%s138 + $0x50] sm:%s131]
        %189 = vst [vmem:[%s139 + $0x60] sm:%s131] %v188
        %v190 = vld [vmem:[%s138 + $0x70] sm:%s131]
        %191 = vst [vmem:[%s139 + $0x64] sm:%s131] %v190
        %v192 = vld [vmem:[%s138 + $0x54] sm:%s131]
        %193 = vst [vmem:[%s139 + $0x68] sm:%s131] %v192
        %v194 = vld [vmem:[%s138 + $0x74] sm:%s131]
        %195 = vst [vmem:[%s139 + $0x6c] sm:%s131] %v194
        %v196 = vld [vmem:[%s138 + $0x58] sm:%s131]
        %197 = vst [vmem:[%s139 + $0x70] sm:%s131] %v196
        %v198 = vld [vmem:[%s138 + $0x78] sm:%s131]
        %199 = vst [vmem:[%s139 + $0x74] sm:%s131] %v198
        %v200 = vld [vmem:[%s138 + $0x5c] sm:%s131]
        %201 = vst [vmem:[%s139 + $0x78] sm:%s131] %v200
        %v202 = vld [vmem:[%s138 + $0x7c] sm:%s131]
        %203 = vst [vmem:[%s139 + $0x7c] sm:%s131] %v202
      $region64: #{forward.1} parent=51 // loop_footer
        %s137 = sadd.s32 1, %s133
      $region65: #{forward.1} parent=51 // loop_footer_branch
        %132 = sbr.rel target = $region61
      $region66: #{forward.1} parent=51 // loop_exit
        _
    $region52: #{forward.1} parent=36 // pred_fallthru
      _
  $region37: #{forward.1} parent=0 // pred_fallthru
    _
  // Predicated region
  $region38: #{forward.1} parent=0 // pred_check
    %p37 = pneg %p33
  $region39: #{forward.1} parent=0 // pred_check_branch
    %39 = sbr.rel (%p37) target = $region41
  $region40: #{forward.1} parent=0 // pred_region
    %s40 = sshllo.u32 0, 4
    loop: start=0, step=1, limit=1
    $region42: #{forward.1} parent=40 // loop_pre_header
      _
    $region43: #{forward.1} parent=40 // loop_header
      %s42 = sphi 0, %s46
      %p43 = scmp.ge.s32.totalorder %s42, 1
      %s47 = sphi %s8, %s8
      %s48 = sphi [#allocation2], [#allocation2]
    $region44: #{forward.1} parent=40 // loop_header_branch
      %45 = sbr.rel (%p43) target = $region48
    $region45: #{forward.1} parent=40 // loop_body
      %v49 = vld [vmem:[%s47] sm:%s40]
      %50 = vst [vmem:[%s48] sm:%s40] %v49
      %v51 = vld [vmem:[%s47 + $0x20] sm:%s40]
      %52 = vst [vmem:[%s48 + $0x4] sm:%s40] %v51
      %v53 = vld [vmem:[%s47 + $0x4] sm:%s40]
      %54 = vst [vmem:[%s48 + $0x8] sm:%s40] %v53
      %v55 = vld [vmem:[%s47 + $0x24] sm:%s40]
      %56 = vst [vmem:[%s48 + $0xc] sm:%s40] %v55
      %v57 = vld [vmem:[%s47 + $0x8] sm:%s40]
      %58 = vst [vmem:[%s48 + $0x10] sm:%s40] %v57
      %v59 = vld [vmem:[%s47 + $0x28] sm:%s40]
      %60 = vst [vmem:[%s48 + $0x14] sm:%s40] %v59
      %v61 = vld [vmem:[%s47 + $0xc] sm:%s40]
      %62 = vst [vmem:[%s48 + $0x18] sm:%s40] %v61
      %v63 = vld [vmem:[%s47 + $0x2c] sm:%s40]
      %64 = vst [vmem:[%s48 + $0x1c] sm:%s40] %v63
      %v65 = vld [vmem:[%s47 + $0x10] sm:%s40]
      %66 = vst [vmem:[%s48 + $0x20] sm:%s40] %v65
      %v67 = vld [vmem:[%s47 + $0x30] sm:%s40]
      %68 = vst [vmem:[%s48 + $0x24] sm:%s40] %v67
      %v69 = vld [vmem:[%s47 + $0x14] sm:%s40]
      %70 = vst [vmem:[%s48 + $0x28] sm:%s40] %v69
      %v71 = vld [vmem:[%s47 + $0x34] sm:%s40]
      %72 = vst [vmem:[%s48 + $0x2c] sm:%s40] %v71
      %v73 = vld [vmem:[%s47 + $0x18] sm:%s40]
      %74 = vst [vmem:[%s48 + $0x30] sm:%s40] %v73
      %v75 = vld [vmem:[%s47 + $0x38] sm:%s40]
      %76 = vst [vmem:[%s48 + $0x34] sm:%s40] %v75
      %v77 = vld [vmem:[%s47 + $0x1c] sm:%s40]
      %78 = vst [vmem:[%s48 + $0x38] sm:%s40] %v77
      %v79 = vld [vmem:[%s47 + $0x3c] sm:%s40]
      %80 = vst [vmem:[%s48 + $0x3c] sm:%s40] %v79
      %v81 = vld [vmem:[%s47 + $0x40] sm:%s40]
      %82 = vst [vmem:[%s48 + $0x40] sm:%s40] %v81
      %v83 = vld [vmem:[%s47 + $0x60] sm:%s40]
      %84 = vst [vmem:[%s48 + $0x44] sm:%s40] %v83
      %v85 = vld [vmem:[%s47 + $0x44] sm:%s40]
      %86 = vst [vmem:[%s48 + $0x48] sm:%s40] %v85
      %v87 = vld [vmem:[%s47 + $0x64] sm:%s40]
      %88 = vst [vmem:[%s48 + $0x4c] sm:%s40] %v87
      %v89 = vld [vmem:[%s47 + $0x48] sm:%s40]
      %90 = vst [vmem:[%s48 + $0x50] sm:%s40] %v89
      %v91 = vld [vmem:[%s47 + $0x68] sm:%s40]
      %92 = vst [vmem:[%s48 + $0x54] sm:%s40] %v91
      %v93 = vld [vmem:[%s47 + $0x4c] sm:%s40]
      %94 = vst [vmem:[%s48 + $0x58] sm:%s40] %v93
      %v95 = vld [vmem:[%s47 + $0x6c] sm:%s40]
      %96 = vst [vmem:[%s48 + $0x5c] sm:%s40] %v95
      %v97 = vld [vmem:[%s47 + $0x50] sm:%s40]
      %98 = vst [vmem:[%s48 + $0x60] sm:%s40] %v97
      %v99 = vld [vmem:[%s47 + $0x70] sm:%s40]
      %100 = vst [vmem:[%s48 + $0x64] sm:%s40] %v99
      %v101 = vld [vmem:[%s47 + $0x54] sm:%s40]
      %102 = vst [vmem:[%s48 + $0x68] sm:%s40] %v101
      %v103 = vld [vmem:[%s47 + $0x74] sm:%s40]
      %104 = vst [vmem:[%s48 + $0x6c] sm:%s40] %v103
      %v105 = vld [vmem:[%s47 + $0x58] sm:%s40]
      %106 = vst [vmem:[%s48 + $0x70] sm:%s40] %v105
      %v107 = vld [vmem:[%s47 + $0x78] sm:%s40]
      %108 = vst [vmem:[%s48 + $0x74] sm:%s40] %v107
      %v109 = vld [vmem:[%s47 + $0x5c] sm:%s40]
      %110 = vst [vmem:[%s48 + $0x78] sm:%s40] %v109
      %v111 = vld [vmem:[%s47 + $0x7c] sm:%s40]
      %112 = vst [vmem:[%s48 + $0x7c] sm:%s40] %v111
    $region46: #{forward.1} parent=40 // loop_footer
      %s46 = sadd.s32 1, %s42
    $region47: #{forward.1} parent=40 // loop_footer_branch
      %41 = sbr.rel target = $region43
    $region48: #{forward.1} parent=40 // loop_exit
      _
  $region41: #{forward.1} parent=0 // pred_fallthru
    _
  // Predicated region
  $region67: #{forward.1} parent=0 // pred_check
    _
  $region68: #{forward.1} parent=0 // pred_check_branch
    %206 = sbr.rel (0) target = $region70
  $region69: #{forward.1} parent=0 // pred_region
    %207 = vsyncadd [#allocation4], 2048
  $region70: #{forward.1} parent=0 // pred_fallthru
    _
  %s208 = scalar_lea.sflag [#allocation4], 1
  // Predicated region
  $region71: #{forward.1} parent=0 // pred_check
    _
  $region72: #{forward.1} parent=0 // pred_check_branch
    %210 = sbr.rel target = $region74
  $region73: #{forward.1} parent=0 // pred_region
    %211 = sst [smem:[#allocation8]] [#allocation7]
    %212 = sst [smem:[#allocation9]] [#allocation6]
  $region74: #{forward.1} parent=0 // pred_fallthru
    _
  %214 = shalt.err (0)
  %s216 = sshll.u32 [#allocation3], 4
  %s217 = int_to_ptr.vmem [resolvable:$true] %s216
  %219 = dma.hbm_to_vmem [thread:$0]  %s9, 8192, %s217, %s208
  %v220 = vld [vmem:[%s0] sm:$0xff]
  %v221 = vld [vmem:[%s0 + $0x8] sm:$0xff]
  %v222 = vld [vmem:[%s3] sm:$0x1]
  %v223 = vld [vmem:[%s3 + $0x1] sm:$0x1]
  %v224 = vld [vmem:[%s3 + $0x2] sm:$0x1]
  %v225 = vld [vmem:[%s3 + $0x3] sm:$0x1]
  %v226 = vld [vmem:[%s3 + $0x4] sm:$0x1]
  %v227 = vld [vmem:[%s3 + $0x5] sm:$0x1]
  %v228 = vld [vmem:[%s3 + $0x6] sm:$0x1]
  %v229 = vld [vmem:[%s3 + $0x7] sm:$0x1]
  %v230 = vld [vmem:[%s3 + $0x8] sm:$0x1]
  %v231 = vld [vmem:[%s3 + $0x9] sm:$0x1]
  %v232 = vld [vmem:[%s2] sm:$0xff]
  %v233 = vld [vmem:[%s2 + $0x8] sm:$0xff]
  %v234 = vld [vmem:[%s2 + $0x10] sm:$0xff]
  %v235 = vld [vmem:[%s2 + $0x18] sm:$0xff]
  %v236 = vlaneseq
  %v237 = vshrl.u32 %v236, 7
  %v238 = vsub.s32 0, %v237
  %v239 = vrot.slane %v222, %v238
  %vm240 = vcmask 261120
  %v242 = vsel %vm240, %v220, 0
  %v245 = vsel %vm240, %v221, 0
  %247 = vmatprep.subr.mxu0 0.0
  %248 = vmatpush1.msra.mxu0 %v232
  %249 = vmatprep.subr.mxu0 0.0
  %250 = vmatpush1.msra.mxu0 %v233
  %251 = vmatprep.subr.mxu0 0.0
  %252 = vmatpush1.msra.mxu0 %v234
  %253 = vmatprep.subr.mxu0 0.0
  %254 = vmatpush1.msra.mxu0 %v235
  %255 = vmatprep.subr.mxu0 0.0
  %256 = vmatpush1.msra.mxu0 0.0
  %257 = vmatprep.subr.mxu0 0.0
  %258 = vmatpush1.msra.mxu0 0.0
  %259 = vmatprep.subr.mxu0 0.0
  %260 = vmatpush1.msra.mxu0 0.0
  %261 = vmatprep.subr.mxu0 0.0
  %262 = vmatpush1.msra.mxu0 0.0
  %263 = vmatprep.subr.mxu0 0.0
  %264 = vmatpush1.msra.mxu0 0.0
  %265 = vmatprep.subr.mxu0 0.0
  %266 = vmatpush1.msra.mxu0 0.0
  %267 = vmatprep.subr.mxu0 0.0
  %268 = vmatpush1.msra.mxu0 0.0
  %269 = vmatprep.subr.mxu0 0.0
  %270 = vmatpush1.msra.mxu0 0.0
  %271 = vmatprep.subr.mxu0 0.0
  %272 = vmatpush1.msra.mxu0 0.0
  %273 = vmatprep.subr.mxu0 0.0
  %274 = vmatpush1.msra.mxu0 0.0
  %275 = vmatprep.subr.mxu0 0.0
  %276 = vmatpush1.msra.mxu0 0.0
  %277 = vmatprep.subr.mxu0 0.0
  %278 = vmatpush1.msra.mxu0 0.0
  %279 = vmatprep.subr.mxu0 0.0
  %280 = vmatpush1.msra.mxu0 0.0
  %281 = vmatprep.subr.mxu0 0.0
  %282 = vmatpush1.msra.mxu0 0.0
  %283 = vmatprep.subr.mxu0 0.0
  %284 = vmatpush1.msra.mxu0 0.0
  %285 = vmatprep.subr.mxu0 0.0
  %286 = vmatpush1.msra.mxu0 0.0
  %287 = vmatprep.subr.mxu0 0.0
  %288 = vmatpush1.msra.mxu0 0.0
  %289 = vmatprep.subr.mxu0 0.0
  %290 = vmatpush1.msra.mxu0 0.0
  %291 = vmatprep.subr.mxu0 0.0
  %292 = vmatpush1.msra.mxu0 0.0
  %293 = vmatprep.subr.mxu0 0.0
  %294 = vmatpush1.msra.mxu0 0.0
  %295 = vmatprep.subr.mxu0 0.0
  %296 = vmatpush1.msra.mxu0 0.0
  %297 = vmatprep.subr.mxu0 0.0
  %298 = vmatpush1.msra.mxu0 0.0
  %299 = vmatprep.subr.mxu0 0.0
  %300 = vmatpush1.msra.mxu0 0.0
  %301 = vmatprep.subr.mxu0 0.0
  %302 = vmatpush1.msra.mxu0 0.0
  %303 = vmatprep.subr.mxu0 0.0
  %304 = vmatpush1.msra.mxu0 0.0
  %305 = vmatprep.subr.mxu0 0.0
  %306 = vmatpush1.msra.mxu0 0.0
  %307 = vmatprep.subr.mxu0 0.0
  %308 = vmatpush1.msra.mxu0 0.0
  %309 = vmatprep.subr.mxu0 0.0
  %310 = vmatpush1.msra.mxu0 0.0
  %311 = vmatprep.mubr.f32.mxu0 0.0
  %312 = vmatmul.mubr.f32.gmra.mrb[0].mxu0 %v242
  %v313 = vpop.f32.mrb[0].mxu0
  %v314 = vadd.f32 %v239, %v313
  %v315 = vpop.f32.mrb[0].mxu0
  %316 = vmatprep.mubr.f32.mxu0 0.0
  %317 = vmatmul.mubr.f32.gmra.mrb[0].mxu0 %v245
  %v318 = vpop.f32.mrb[0].mxu0
  %v319 = vadd.f32 %v239, %v318
  %v320 = vpop.f32.mrb[0].mxu0
  %321 = vdwg.mxu0
  %s322 = scalar_lea.vmem %s2, 32
  %v323 = vld [vmem:[%s322] sm:$0xff]
  %v324 = vld [vmem:[%s322 + $0x8] sm:$0xff]
  %v325 = vld [vmem:[%s322 + $0x10] sm:$0xff]
  %v326 = vld [vmem:[%s322 + $0x18] sm:$0xff]
  %v327 = vlaneseq
  %v328 = vshrl.u32 %v327, 7
  %v329 = vsub.s32 0, %v328
  %v330 = vrot.slane %v223, %v329
  %331 = vmatprep.subr.mxu0 0.0
  %332 = vmatpush1.msra.mxu0 %v323
  %333 = vmatprep.subr.mxu0 0.0
  %334 = vmatpush1.msra.mxu0 %v324
  %335 = vmatprep.subr.mxu0 0.0
  %336 = vmatpush1.msra.mxu0 %v325
  %337 = vmatprep.subr.mxu0 0.0
  %338 = vmatpush1.msra.mxu0 %v326
  %339 = vmatprep.subr.mxu0 0.0
  %340 = vmatpush1.msra.mxu0 0.0
  %341 = vmatprep.subr.mxu0 0.0
  %342 = vmatpush1.msra.mxu0 0.0
  %343 = vmatprep.subr.mxu0 0.0
  %344 = vmatpush1.msra.mxu0 0.0
  %345 = vmatprep.subr.mxu0 0.0
  %346 = vmatpush1.msra.mxu0 0.0
  %347 = vmatprep.subr.mxu0 0.0
  %348 = vmatpush1.msra.mxu0 0.0
  %349 = vmatprep.subr.mxu0 0.0
  %350 = vmatpush1.msra.mxu0 0.0
  %351 = vmatprep.subr.mxu0 0.0
  %352 = vmatpush1.msra.mxu0 0.0
  %353 = vmatprep.subr.mxu0 0.0
  %354 = vmatpush1.msra.mxu0 0.0
  %355 = vmatprep.subr.mxu0 0.0
  %356 = vmatpush1.msra.mxu0 0.0
  %357 = vmatprep.subr.mxu0 0.0
  %358 = vmatpush1.msra.mxu0 0.0
  %359 = vmatprep.subr.mxu0 0.0
  %360 = vmatpush1.msra.mxu0 0.0
  %361 = vmatprep.subr.mxu0 0.0
  %362 = vmatpush1.msra.mxu0 0.0
  %363 = vmatprep.subr.mxu0 0.0
  %364 = vmatpush1.msra.mxu0 0.0
  %365 = vmatprep.subr.mxu0 0.0
  %366 = vmatpush1.msra.mxu0 0.0
  %367 = vmatprep.subr.mxu0 0.0
  %368 = vmatpush1.msra.mxu0 0.0
  %369 = vmatprep.subr.mxu0 0.0
  %370 = vmatpush1.msra.mxu0 0.0
  %371 = vmatprep.subr.mxu0 0.0
  %372 = vmatpush1.msra.mxu0 0.0
  %373 = vmatprep.subr.mxu0 0.0
  %374 = vmatpush1.msra.mxu0 0.0
  %375 = vmatprep.subr.mxu0 0.0
  %376 = vmatpush1.msra.mxu0 0.0
  %377 = vmatprep.subr.mxu0 0.0
  %378 = vmatpush1.msra.mxu0 0.0
  %379 = vmatprep.subr.mxu0 0.0
  %380 = vmatpush1.msra.mxu0 0.0
  %381 = vmatprep.subr.mxu0 0.0
  %382 = vmatpush1.msra.mxu0 0.0
  %383 = vmatprep.subr.mxu0 0.0
  %384 = vmatpush1.msra.mxu0 0.0
  %385 = vmatprep.subr.mxu0 0.0
  %386 = vmatpush1.msra.mxu0 0.0
  %387 = vmatprep.subr.mxu0 0.0
  %388 = vmatpush1.msra.mxu0 0.0
  %389 = vmatprep.subr.mxu0 0.0
  %390 = vmatpush1.msra.mxu0 0.0
  %391 = vmatprep.subr.mxu0 0.0
  %392 = vmatpush1.msra.mxu0 0.0
  %393 = vmatprep.subr.mxu0 0.0
  %394 = vmatpush1.msra.mxu0 0.0
  %395 = vmatprep.mubr.f32.mxu0 0.0
  %396 = vmatmul.mubr.f32.gmra.mrb[0].mxu0 %v242
  %v397 = vpop.f32.mrb[0].mxu0
  %v398 = vadd.f32 %v330, %v397
  %v399 = vpop.f32.mrb[0].mxu0
  %400 = vmatprep.mubr.f32.mxu0 0.0
  %401 = vmatmul.mubr.f32.gmra.mrb[0].mxu0 %v245
  %v402 = vpop.f32.mrb[0].mxu0
  %v403 = vadd.f32 %v330, %v402
  %v404 = vpop.f32.mrb[0].mxu0
  %405 = vdwg.mxu0
  %s406 = scalar_lea.vmem %s2, 64
  %v407 = vld [vmem:[%s406] sm:$0xff]
  %v408 = vld [vmem:[%s406 + $0x8] sm:$0xff]
  %v409 = vld [vmem:[%s406 + $0x10] sm:$0xff]
  %v410 = vld [vmem:[%s406 + $0x18] sm:$0xff]
  %v411 = vlaneseq
  %v412 = vshrl.u32 %v411, 7
  %v413 = vsub.s32 0, %v412
  %v414 = vrot.slane %v224, %v413
  %415 = vmatprep.subr.mxu0 0.0
  %416 = vmatpush1.msra.mxu0 %v407
  %417 = vmatprep.subr.mxu0 0.0
  %418 = vmatpush1.msra.mxu0 %v408
  %419 = vmatprep.subr.mxu0 0.0
  %420 = vmatpush1.msra.mxu0 %v409
  %421 = vmatprep.subr.mxu0 0.0
  %422 = vmatpush1.msra.mxu0 %v410
  %423 = vmatprep.subr.mxu0 0.0
  %424 = vmatpush1.msra.mxu0 0.0
  %425 = vmatprep.subr.mxu0 0.0
  %426 = vmatpush1.msra.mxu0 0.0
  %427 = vmatprep.subr.mxu0 0.0
  %428 = vmatpush1.msra.mxu0 0.0
  %429 = vmatprep.subr.mxu0 0.0
  %430 = vmatpush1.msra.mxu0 0.0
  %431 = vmatprep.subr.mxu0 0.0
  %432 = vmatpush1.msra.mxu0 0.0
  %433 = vmatprep.subr.mxu0 0.0
  %434 = vmatpush1.msra.mxu0 0.0
  %435 = vmatprep.subr.mxu0 0.0
  %436 = vmatpush1.msra.mxu0 0.0
  %437 = vmatprep.subr.mxu0 0.0
  %438 = vmatpush1.msra.mxu0 0.0
  %439 = vmatprep.subr.mxu0 0.0
  %440 = vmatpush1.msra.mxu0 0.0
  %441 = vmatprep.subr.mxu0 0.0
  %442 = vmatpush1.msra.mxu0 0.0
  %443 = vmatprep.subr.mxu0 0.0
  %444 = vmatpush1.msra.mxu0 0.0
  %445 = vmatprep.subr.mxu0 0.0
  %446 = vmatpush1.msra.mxu0 0.0
  %447 = vmatprep.subr.mxu0 0.0
  %448 = vmatpush1.msra.mxu0 0.0
  %449 = vmatprep.subr.mxu0 0.0
  %450 = vmatpush1.msra.mxu0 0.0
  %451 = vmatprep.subr.mxu0 0.0
  %452 = vmatpush1.msra.mxu0 0.0
  %453 = vmatprep.subr.mxu0 0.0
  %454 = vmatpush1.msra.mxu0 0.0
  %455 = vmatprep.subr.mxu0 0.0
  %456 = vmatpush1.msra.mxu0 0.0
  %457 = vmatprep.subr.mxu0 0.0
  %458 = vmatpush1.msra.mxu0 0.0
  %459 = vmatprep.subr.mxu0 0.0
  %460 = vmatpush1.msra.mxu0 0.0
  %461 = vmatprep.subr.mxu0 0.0
  %462 = vmatpush1.msra.mxu0 0.0
  %463 = vmatprep.subr.mxu0 0.0
  %464 = vmatpush1.msra.mxu0 0.0
  %465 = vmatprep.subr.mxu0 0.0
  %466 = vmatpush1.msra.mxu0 0.0
  %467 = vmatprep.subr.mxu0 0.0
  %468 = vmatpush1.msra.mxu0 0.0
  %469 = vmatprep.subr.mxu0 0.0
  %470 = vmatpush1.msra.mxu0 0.0
  %471 = vmatprep.subr.mxu0 0.0
  %472 = vmatpush1.msra.mxu0 0.0
  %473 = vmatprep.subr.mxu0 0.0
  %474 = vmatpush1.msra.mxu0 0.0
  %475 = vmatprep.subr.mxu0 0.0
  %476 = vmatpush1.msra.mxu0 0.0
  %477 = vmatprep.subr.mxu0 0.0
  %478 = vmatpush1.msra.mxu0 0.0
  %479 = vmatprep.mubr.f32.mxu0 0.0
  %480 = vmatmul.mubr.f32.gmra.mrb[0].mxu0 %v242
  %v481 = vpop.f32.mrb[0].mxu0
  %v482 = vadd.f32 %v414, %v481
  %v483 = vpop.f32.mrb[0].mxu0
  %484 = vmatprep.mubr.f32.mxu0 0.0
  %485 = vmatmul.mubr.f32.gmra.mrb[0].mxu0 %v245
  %v486 = vpop.f32.mrb[0].mxu0
  %v487 = vadd.f32 %v414, %v486
  %v488 = vpop.f32.mrb[0].mxu0
  %489 = vdwg.mxu0
  %v490 = vld [vmem:[%s1] sm:$0xff]
  %v491 = vld [vmem:[%s1 + $0x8] sm:$0xff]
  %v493 = vsel %vm240, %v314, 0
  %v496 = vsel %vm240, %v319, 0
  %v499 = vsel %vm240, %v398, 0
  %v502 = vsel %vm240, %v403, 0
  %504 = vmatprep.subr.mxu0 0.0
  %505 = vmatpush1.xpose.msra.mxu0 %v499
  %506 = vmatprep.subr.mxu0 0.0
  %507 = vmatpush1.xpose.msra.mxu0 %v502
  %508 = vmatprep.subr.mxu0 0.0
  %509 = vmatpush1.xpose.msra.mxu0 0.0
  %510 = vmatprep.subr.mxu0 0.0
  %511 = vmatpush1.xpose.msra.mxu0 0.0
  %512 = vmatprep.subr.mxu0 0.0
  %513 = vmatpush1.xpose.msra.mxu0 0.0
  %514 = vmatprep.subr.mxu0 0.0
  %515 = vmatpush1.xpose.msra.mxu0 0.0
  %516 = vmatprep.subr.mxu0 0.0
  %517 = vmatpush1.xpose.msra.mxu0 0.0
  %518 = vmatprep.subr.mxu0 0.0
  %519 = vmatpush1.xpose.msra.mxu0 0.0
  %520 = vmatprep.subr.mxu0 0.0
  %521 = vmatpush1.xpose.msra.mxu0 0.0
  %522 = vmatprep.subr.mxu0 0.0
  %523 = vmatpush1.xpose.msra.mxu0 0.0
  %524 = vmatprep.subr.mxu0 0.0
  %525 = vmatpush1.xpose.msra.mxu0 0.0
  %526 = vmatprep.subr.mxu0 0.0
  %527 = vmatpush1.xpose.msra.mxu0 0.0
  %528 = vmatprep.subr.mxu0 0.0
  %529 = vmatpush1.xpose.msra.mxu0 0.0
  %530 = vmatprep.subr.mxu0 0.0
  %531 = vmatpush1.xpose.msra.mxu0 0.0
  %532 = vmatprep.subr.mxu0 0.0
  %533 = vmatpush1.xpose.msra.mxu0 0.0
  %534 = vmatprep.subr.mxu0 0.0
  %535 = vmatpush1.xpose.msra.mxu0 0.0
  %536 = vmatprep.subr.mxu0 0.0
  %537 = vmatpush1.xpose.msra.mxu0 0.0
  %538 = vmatprep.subr.mxu0 0.0
  %539 = vmatpush1.xpose.msra.mxu0 0.0
  %540 = vmatprep.subr.mxu0 0.0
  %541 = vmatpush1.xpose.msra.mxu0 0.0
  %542 = vmatprep.subr.mxu0 0.0
  %543 = vmatpush1.xpose.msra.mxu0 0.0
  %544 = vmatprep.subr.mxu0 0.0
  %545 = vmatpush1.xpose.msra.mxu0 0.0
  %546 = vmatprep.subr.mxu0 0.0
  %547 = vmatpush1.xpose.msra.mxu0 0.0
  %548 = vmatprep.subr.mxu0 0.0
  %549 = vmatpush1.xpose.msra.mxu0 0.0
  %550 = vmatprep.subr.mxu0 0.0
  %551 = vmatpush1.xpose.msra.mxu0 0.0
  %552 = vmatprep.subr.mxu0 0.0
  %553 = vmatpush1.xpose.msra.mxu0 0.0
  %554 = vmatprep.subr.mxu0 0.0
  %555 = vmatpush1.xpose.msra.mxu0 0.0
  %556 = vmatprep.subr.mxu0 0.0
  %557 = vmatpush1.xpose.msra.mxu0 0.0
  %558 = vmatprep.subr.mxu0 0.0
  %559 = vmatpush1.xpose.msra.mxu0 0.0
  %560 = vmatprep.subr.mxu0 0.0
  %561 = vmatpush1.xpose.msra.mxu0 0.0
  %562 = vmatprep.subr.mxu0 0.0
  %563 = vmatpush1.xpose.msra.mxu0 0.0
  %564 = vmatprep.subr.mxu0 0.0
  %565 = vmatpush1.xpose.msra.mxu0 0.0
  %566 = vmatprep.subr.mxu0 0.0
  %567 = vmatpush1.xpose.msra.mxu0 0.0
  %568 = vmatprep.mubr.f32.mxu0 0.0
  %569 = vmatmul.mubr.f32.gmra.mrb[0].mxu0 %v493
  %v570 = vpop.f32.mrb[0].mxu0
  %v571 = vadd.f32 %v490, %v570
  %v572 = vpop.f32.mrb[0].mxu0
  %573 = vmatprep.mubr.f32.mxu0 0.0
  %574 = vmatmul.mubr.f32.gmra.mrb[0].mxu0 %v496
  %v575 = vpop.f32.mrb[0].mxu0
  %v576 = vadd.f32 %v491, %v575
  %v577 = vpop.f32.mrb[0].mxu0
  %578 = vdwg.mxu0
  %vm579 = vcmask 130048
  %v580 = vsel %vm579, %v571, -inf
  %581 = vmax.xlane.f32.xlu0 %v580
  %v582 = vpop.xlane.xlu0 %581
  %v583 = vsel %vm579, %v576, -inf
  %584 = vmax.xlane.f32.xlu0 %v583
  %v585 = vpop.xlane.xlu0 %584
  %v586 = vsub.f32 %v571, %v582
  %v587 = vsub.f32 %v576, %v585
  %v588 = vmul.f32 %v586, 1.442695
  %v589 = vpow.pop %v588
  %v590 = vmul.f32 %v587, 1.442695
  %v591 = vpow.pop %v590
  %v592 = vsel %vm579, %v589, 0.0
  %593 = vadd.xlane.f32.xlu0 %v592
  %v594 = vpop.xlane.xlu0 %593
  %v595 = vsel %vm579, %v591, 0.0
  %596 = vadd.xlane.f32.xlu0 %v595
  %v597 = vpop.xlane.xlu0 %596
  %v598 = vrcp.pop %v594
  %v599 = vrcp.pop %v597
  %v600 = vmul.f32 %v589, %v598
  %v601 = vmul.f32 %v591, %v599
  %v603 = vsel %vm579, %v600, 0
  %v606 = vsel %vm579, %v601, 0
  %608 = vmatprep.subr.mxu0 0.0
  %609 = vmatpush1.msra.mxu0 %v482
  %610 = vmatprep.subr.mxu0 0.0
  %611 = vmatpush1.msra.mxu0 %v487
  %612 = vmatprep.subr.mxu0 0.0
  %613 = vmatpush1.msra.mxu0 0.0
  %614 = vmatprep.subr.mxu0 0.0
  %615 = vmatpush1.msra.mxu0 0.0
  %616 = vmatprep.subr.mxu0 0.0
  %617 = vmatpush1.msra.mxu0 0.0
  %618 = vmatprep.subr.mxu0 0.0
  %619 = vmatpush1.msra.mxu0 0.0
  %620 = vmatprep.subr.mxu0 0.0
  %621 = vmatpush1.msra.mxu0 0.0
  %622 = vmatprep.subr.mxu0 0.0
  %623 = vmatpush1.msra.mxu0 0.0
  %624 = vmatprep.subr.mxu0 0.0
  %625 = vmatpush1.msra.mxu0 0.0
  %626 = vmatprep.subr.mxu0 0.0
  %627 = vmatpush1.msra.mxu0 0.0
  %628 = vmatprep.subr.mxu0 0.0
  %629 = vmatpush1.msra.mxu0 0.0
  %630 = vmatprep.subr.mxu0 0.0
  %631 = vmatpush1.msra.mxu0 0.0
  %632 = vmatprep.subr.mxu0 0.0
  %633 = vmatpush1.msra.mxu0 0.0
  %634 = vmatprep.subr.mxu0 0.0
  %635 = vmatpush1.msra.mxu0 0.0
  %636 = vmatprep.subr.mxu0 0.0
  %637 = vmatpush1.msra.mxu0 0.0
  %638 = vmatprep.subr.mxu0 0.0
  %639 = vmatpush1.msra.mxu0 0.0
  %640 = vmatprep.subr.mxu0 0.0
  %641 = vmatpush1.msra.mxu0 0.0
  %642 = vmatprep.subr.mxu0 0.0
  %643 = vmatpush1.msra.mxu0 0.0
  %644 = vmatprep.subr.mxu0 0.0
  %645 = vmatpush1.msra.mxu0 0.0
  %646 = vmatprep.subr.mxu0 0.0
  %647 = vmatpush1.msra.mxu0 0.0
  %648 = vmatprep.subr.mxu0 0.0
  %649 = vmatpush1.msra.mxu0 0.0
  %650 = vmatprep.subr.mxu0 0.0
  %651 = vmatpush1.msra.mxu0 0.0
  %652 = vmatprep.subr.mxu0 0.0
  %653 = vmatpush1.msra.mxu0 0.0
  %654 = vmatprep.subr.mxu0 0.0
  %655 = vmatpush1.msra.mxu0 0.0
  %656 = vmatprep.subr.mxu0 0.0
  %657 = vmatpush1.msra.mxu0 0.0
  %658 = vmatprep.subr.mxu0 0.0
  %659 = vmatpush1.msra.mxu0 0.0
  %660 = vmatprep.subr.mxu0 0.0
  %661 = vmatpush1.msra.mxu0 0.0
  %662 = vmatprep.subr.mxu0 0.0
  %663 = vmatpush1.msra.mxu0 0.0
  %664 = vmatprep.subr.mxu0 0.0
  %665 = vmatpush1.msra.mxu0 0.0
  %666 = vmatprep.subr.mxu0 0.0
  %667 = vmatpush1.msra.mxu0 0.0
  %668 = vmatprep.subr.mxu0 0.0
  %669 = vmatpush1.msra.mxu0 0.0
  %670 = vmatprep.subr.mxu0 0.0
  %671 = vmatpush1.msra.mxu0 0.0
  %672 = vmatprep.mubr.f32.mxu0 0.0
  %673 = vmatmul.mubr.f32.gmra.mrb[0].mxu0 %v603
  %v674 = vpop.f32.mrb[0].mxu0
  %v675 = vadd.f32 0.0, %v674
  %v676 = vpop.f32.mrb[0].mxu0
  %677 = vmatprep.mubr.f32.mxu0 0.0
  %678 = vmatmul.mubr.f32.gmra.mrb[0].mxu0 %v606
  %v679 = vpop.f32.mrb[0].mxu0
  %v680 = vadd.f32 0.0, %v679
  %v681 = vpop.f32.mrb[0].mxu0
  %682 = vdwg.mxu0
  %s683 = scalar_lea.vmem %s2, 96
  %v684 = vld [vmem:[%s683] sm:$0xff]
  %v685 = vld [vmem:[%s683 + $0x8] sm:$0xff]
  %v686 = vld [vmem:[%s683 + $0x10] sm:$0xff]
  %v687 = vld [vmem:[%s683 + $0x18] sm:$0xff]
  %v688 = vlaneseq
  %v689 = vshrl.u32 %v688, 7
  %v690 = vsub.s32 0, %v689
  %v691 = vrot.slane %v225, %v690
  %v693 = vsel %vm240, %v675, 0
  %v696 = vsel %vm240, %v680, 0
  %698 = vmatprep.subr.mxu0 0.0
  %699 = vmatpush1.msra.mxu0 %v684
  %700 = vmatprep.subr.mxu0 0.0
  %701 = vmatpush1.msra.mxu0 %v685
  %702 = vmatprep.subr.mxu0 0.0
  %703 = vmatpush1.msra.mxu0 %v686
  %704 = vmatprep.subr.mxu0 0.0
  %705 = vmatpush1.msra.mxu0 %v687
  %706 = vmatprep.subr.mxu0 0.0
  %707 = vmatpush1.msra.mxu0 0.0
  %708 = vmatprep.subr.mxu0 0.0
  %709 = vmatpush1.msra.mxu0 0.0
  %710 = vmatprep.subr.mxu0 0.0
  %711 = vmatpush1.msra.mxu0 0.0
  %712 = vmatprep.subr.mxu0 0.0
  %713 = vmatpush1.msra.mxu0 0.0
  %714 = vmatprep.subr.mxu0 0.0
  %715 = vmatpush1.msra.mxu0 0.0
  %716 = vmatprep.subr.mxu0 0.0
  %717 = vmatpush1.msra.mxu0 0.0
  %718 = vmatprep.subr.mxu0 0.0
  %719 = vmatpush1.msra.mxu0 0.0
  %720 = vmatprep.subr.mxu0 0.0
  %721 = vmatpush1.msra.mxu0 0.0
  %722 = vmatprep.subr.mxu0 0.0
  %723 = vmatpush1.msra.mxu0 0.0
  %724 = vmatprep.subr.mxu0 0.0
  %725 = vmatpush1.msra.mxu0 0.0
  %726 = vmatprep.subr.mxu0 0.0
  %727 = vmatpush1.msra.mxu0 0.0
  %728 = vmatprep.subr.mxu0 0.0
  %729 = vmatpush1.msra.mxu0 0.0
  %730 = vmatprep.subr.mxu0 0.0
  %731 = vmatpush1.msra.mxu0 0.0
  %732 = vmatprep.subr.mxu0 0.0
  %733 = vmatpush1.msra.mxu0 0.0
  %734 = vmatprep.subr.mxu0 0.0
  %735 = vmatpush1.msra.mxu0 0.0
  %736 = vmatprep.subr.mxu0 0.0
  %737 = vmatpush1.msra.mxu0 0.0
  %738 = vmatprep.subr.mxu0 0.0
  %739 = vmatpush1.msra.mxu0 0.0
  %740 = vmatprep.subr.mxu0 0.0
  %741 = vmatpush1.msra.mxu0 0.0
  %742 = vmatprep.subr.mxu0 0.0
  %743 = vmatpush1.msra.mxu0 0.0
  %744 = vmatprep.subr.mxu0 0.0
  %745 = vmatpush1.msra.mxu0 0.0
  %746 = vmatprep.subr.mxu0 0.0
  %747 = vmatpush1.msra.mxu0 0.0
  %748 = vmatprep.subr.mxu0 0.0
  %749 = vmatpush1.msra.mxu0 0.0
  %750 = vmatprep.subr.mxu0 0.0
  %751 = vmatpush1.msra.mxu0 0.0
  %752 = vmatprep.subr.mxu0 0.0
  %753 = vmatpush1.msra.mxu0 0.0
  %754 = vmatprep.subr.mxu0 0.0
  %755 = vmatpush1.msra.mxu0 0.0
  %756 = vmatprep.subr.mxu0 0.0
  %757 = vmatpush1.msra.mxu0 0.0
  %758 = vmatprep.subr.mxu0 0.0
  %759 = vmatpush1.msra.mxu0 0.0
  %760 = vmatprep.subr.mxu0 0.0
  %761 = vmatpush1.msra.mxu0 0.0
  %762 = vmatprep.mubr.f32.mxu0 0.0
  %763 = vmatmul.mubr.f32.gmra.mrb[0].mxu0 %v693
  %v764 = vpop.f32.mrb[0].mxu0
  %v765 = vadd.f32 %v691, %v764
  %v766 = vpop.f32.mrb[0].mxu0
  %767 = vmatprep.mubr.f32.mxu0 0.0
  %768 = vmatmul.mubr.f32.gmra.mrb[0].mxu0 %v696
  %v769 = vpop.f32.mrb[0].mxu0
  %v770 = vadd.f32 %v691, %v769
  %v771 = vpop.f32.mrb[0].mxu0
  %772 = vdwg.mxu0
  %v773 = vadd.f32 %v220, %v765
  %v774 = vadd.f32 %v221, %v770
  %v775 = vsel %vm240, %v773, 0.0
  %776 = vadd.xlane.f32.xlu0 %v775
  %v777 = vpop.xlane.xlu0 %776
  %v778 = vsel %vm240, %v774, 0.0
  %779 = vadd.xlane.f32.xlu0 %v778
  %v780 = vpop.xlane.xlu0 %779
  %v781 = vrcp.pop 32.0
  %v782 = vmul.f32 %v777, %v781
  %v783 = vmul.f32 %v780, %v781
  %v784 = vsub.f32 %v773, %v782
  %v785 = vsub.f32 %v774, %v783
  %v786 = vmul.f32 %v784, %v784
  %v787 = vmul.f32 %v785, %v785
  %v788 = vsel %vm240, %v786, 0.0
  %789 = vadd.xlane.f32.xlu0 %v788
  %v790 = vpop.xlane.xlu0 %789
  %v791 = vsel %vm240, %v787, 0.0
  %792 = vadd.xlane.f32.xlu0 %v791
  %v793 = vpop.xlane.xlu0 %792
  %v794 = vmul.f32 %v790, %v781
  %v795 = vmul.f32 %v793, %v781
  %v796 = vadd.f32 %v794, 1e-05
  %v797 = vadd.f32 %v795, 1e-05
  %v798 = vrsqrt.pop %v796
  %v799 = vrsqrt.pop %v797
  %v800 = vmul.f32 %v784, %v798
  %v801 = vmul.f32 %v785, %v799
  %v802 = vlaneseq
  %v803 = vshrl.u32 %v802, 7
  %v804 = vsub.s32 0, %v803
  %v805 = vrot.slane %v228, %v804
  %v806 = vmul.f32 %v800, %v805
  %v807 = vmul.f32 %v801, %v805
  %v808 = vlaneseq
  %v809 = vshrl.u32 %v808, 7
  %v810 = vsub.s32 0, %v809
  %v811 = vrot.slane %v229, %v810
  %v812 = vadd.f32 %v806, %v811
  %v813 = vadd.f32 %v807, %v811
  %v814 = vpack.c.bf16 %v813, %v812
  %v815 = vld [vmem:[%s4] sm:$0xf]
  %v816 = vld [vmem:[%s4 + $0x4] sm:$0xf]
  %v817 = vld [vmem:[%s4 + $0x8] sm:$0xf]
  %v818 = vld [vmem:[%s4 + $0xc] sm:$0xf]
  %v819 = vlaneseq
  %v820 = vshrl.u32 %v819, 7
  %v821 = vsub.s32 0, %v820
  %v822 = vrot.slane %v226, %v821
  %v827 = vunpack.c.l.b16 %v815
  %v828 = vunpack.c.l.b16 %v816
  %v829 = vunpack.c.l.b16 %v817
  %v830 = vunpack.c.l.b16 %v818
  %v831 = vpack.c.b16 %v828, %v827
  %v832 = vpack.c.b16 %v830, %v829
  %v836 = vsel %vm240, %v814, 0
  %838 = vmatprep.subr.bf16.mxu0 0
  %839 = vmatpush1.bf16.msra.mxu0 %v831
  %840 = vmatprep.subr.bf16.mxu0 0
  %841 = vmatpush1.bf16.msra.mxu0 %v832
  %842 = vmatprep.subr.bf16.mxu0 0
  %843 = vmatpush1.bf16.msra.mxu0 0
  %844 = vmatprep.subr.bf16.mxu0 0
  %845 = vmatpush1.bf16.msra.mxu0 0
  %846 = vmatprep.subr.bf16.mxu0 0
  %847 = vmatpush1.bf16.msra.mxu0 0
  %848 = vmatprep.subr.bf16.mxu0 0
  %849 = vmatpush1.bf16.msra.mxu0 0
  %850 = vmatprep.subr.bf16.mxu0 0
  %851 = vmatpush1.bf16.msra.mxu0 0
  %852 = vmatprep.subr.bf16.mxu0 0
  %853 = vmatpush1.bf16.msra.mxu0 0
  %854 = vmatprep.subr.bf16.mxu0 0
  %855 = vmatpush1.bf16.msra.mxu0 0
  %856 = vmatprep.subr.bf16.mxu0 0
  %857 = vmatpush1.bf16.msra.mxu0 0
  %858 = vmatprep.subr.bf16.mxu0 0
  %859 = vmatpush1.bf16.msra.mxu0 0
  %860 = vmatprep.subr.bf16.mxu0 0
  %861 = vmatpush1.bf16.msra.mxu0 0
  %862 = vmatprep.subr.bf16.mxu0 0
  %863 = vmatpush1.bf16.msra.mxu0 0
  %864 = vmatprep.subr.bf16.mxu0 0
  %865 = vmatpush1.bf16.msra.mxu0 0
  %866 = vmatprep.subr.bf16.mxu0 0
  %867 = vmatpush1.bf16.msra.mxu0 0
  %868 = vmatprep.subr.bf16.mxu0 0
  %869 = vmatpush1.bf16.msra.mxu0 0
  %870 = vmatprep.mubr.bf16.mxu0 0
  %871 = vmatmul.mubr.bf16.gmra.mrb[0].mxu0 %v836
  %v872 = vpop.f32.mrb[0].mxu0
  %v873 = vadd.f32 %v822, %v872
  %v874 = vpop.f32.mrb[0].mxu0
  %v875 = vpop.f32.mrb[0].mxu0
  %v876 = vadd.f32 %v822, %v875
  %v877 = vpop.f32.mrb[0].mxu0
  %878 = vdwg.mxu0
  %v879 = vmul.f32 %v873, %v873
  %v880 = vmul.f32 %v876, %v876
  %v881 = vmul.f32 %v873, %v879
  %v882 = vmul.f32 %v876, %v880
  %v883 = vmul.f32 %v881, 0.044715
  %v884 = vmul.f32 %v882, 0.044715
  %v885 = vadd.f32 %v873, %v883
  %v886 = vadd.f32 %v876, %v884
  %v887 = vmul.f32 %v885, 0.7978846
  %v888 = vmul.f32 %v886, 0.7978846
  %v889 = vtanh.pop %v887
  %v890 = vtanh.pop %v888
  %v891 = vadd.f32 %v889, 1.0
  %v892 = vadd.f32 %v890, 1.0
  %v893 = vmul.f32 %v891, 0.5
  %v894 = vmul.f32 %v892, 0.5
  %v895 = vmul.f32 %v873, %v893
  %v896 = vmul.f32 %v876, %v894
  %v897 = vpack.c.bf16 %v896, %v895
  %v898 = vld [vmem:[%s5] sm:$0xf]
  %v899 = vld [vmem:[%s5 + $0x4] sm:$0xf]
  %v900 = vld [vmem:[%s5 + $0x8] sm:$0xf]
  %v901 = vld [vmem:[%s5 + $0xc] sm:$0xf]
  %v902 = vld [vmem:[%s5 + $0x10] sm:$0xf]
  %v903 = vld [vmem:[%s5 + $0x14] sm:$0xf]
  %v904 = vld [vmem:[%s5 + $0x18] sm:$0xf]
  %v905 = vld [vmem:[%s5 + $0x1c] sm:$0xf]
  %v906 = vlaneseq
  %v907 = vshrl.u32 %v906, 7
  %v908 = vsub.s32 0, %v907
  %v909 = vrot.slane %v227, %v908
  %v918 = vunpack.c.l.b16 %v898
  %v919 = vunpack.c.l.b16 %v899
  %v920 = vunpack.c.l.b16 %v900
  %v921 = vunpack.c.l.b16 %v901
  %v922 = vunpack.c.l.b16 %v902
  %v923 = vunpack.c.l.b16 %v903
  %v924 = vunpack.c.l.b16 %v904
  %v925 = vunpack.c.l.b16 %v905
  %v926 = vpack.c.b16 %v919, %v918
  %v927 = vpack.c.b16 %v921, %v920
  %v928 = vpack.c.b16 %v923, %v922
  %v929 = vpack.c.b16 %v925, %v924
  %vm934 = vcmask 523264
  %v936 = vsel %vm934, %v897, 0
  %938 = vmatprep.subr.bf16.mxu0 0
  %939 = vmatpush1.bf16.msra.mxu0 %v926
  %940 = vmatprep.subr.bf16.mxu0 0
  %941 = vmatpush1.bf16.msra.mxu0 %v927
  %942 = vmatprep.subr.bf16.mxu0 0
  %943 = vmatpush1.bf16.msra.mxu0 %v928
  %944 = vmatprep.subr.bf16.mxu0 0
  %945 = vmatpush1.bf16.msra.mxu0 %v929
  %946 = vmatprep.subr.bf16.mxu0 0
  %947 = vmatpush1.bf16.msra.mxu0 0
  %948 = vmatprep.subr.bf16.mxu0 0
  %949 = vmatpush1.bf16.msra.mxu0 0
  %950 = vmatprep.subr.bf16.mxu0 0
  %951 = vmatpush1.bf16.msra.mxu0 0
  %952 = vmatprep.subr.bf16.mxu0 0
  %953 = vmatpush1.bf16.msra.mxu0 0
  %954 = vmatprep.subr.bf16.mxu0 0
  %955 = vmatpush1.bf16.msra.mxu0 0
  %956 = vmatprep.subr.bf16.mxu0 0
  %957 = vmatpush1.bf16.msra.mxu0 0
  %958 = vmatprep.subr.bf16.mxu0 0
  %959 = vmatpush1.bf16.msra.mxu0 0
  %960 = vmatprep.subr.bf16.mxu0 0
  %961 = vmatpush1.bf16.msra.mxu0 0
  %962 = vmatprep.subr.bf16.mxu0 0
  %963 = vmatpush1.bf16.msra.mxu0 0
  %964 = vmatprep.subr.bf16.mxu0 0
  %965 = vmatpush1.bf16.msra.mxu0 0
  %966 = vmatprep.subr.bf16.mxu0 0
  %967 = vmatpush1.bf16.msra.mxu0 0
  %968 = vmatprep.subr.bf16.mxu0 0
  %969 = vmatpush1.bf16.msra.mxu0 0
  %970 = vmatprep.mubr.bf16.mxu0 0
  %971 = vmatmul.mubr.bf16.gmra.mrb[0].mxu0 %v936
  %v972 = vpop.f32.mrb[0].mxu0
  %v973 = vadd.f32 %v909, %v972
  %v974 = vpop.f32.mrb[0].mxu0
  %v975 = vpop.f32.mrb[0].mxu0
  %v976 = vadd.f32 %v909, %v975
  %v977 = vpop.f32.mrb[0].mxu0
  %978 = vdwg.mxu0
  %v979 = vadd.f32 %v812, %v973
  %v980 = vadd.f32 %v813, %v976
  %v981 = vsel %vm240, %v979, 0.0
  %982 = vadd.xlane.f32.xlu0 %v981
  %v983 = vpop.xlane.xlu0 %982
  %v984 = vsel %vm240, %v980, 0.0
  %985 = vadd.xlane.f32.xlu0 %v984
  %v986 = vpop.xlane.xlu0 %985
  %v987 = vmul.f32 %v983, %v781
  %v988 = vmul.f32 %v986, %v781
  %v989 = vsub.f32 %v979, %v987
  %v990 = vsub.f32 %v980, %v988
  %v991 = vmul.f32 %v989, %v989
  %v992 = vmul.f32 %v990, %v990
  %v993 = vsel %vm240, %v991, 0.0
  %994 = vadd.xlane.f32.xlu0 %v993
  %v995 = vpop.xlane.xlu0 %994
  %v996 = vsel %vm240, %v992, 0.0
  %997 = vadd.xlane.f32.xlu0 %v996
  %v998 = vpop.xlane.xlu0 %997
  %v999 = vmul.f32 %v995, %v781
  %v1000 = vmul.f32 %v998, %v781
  %v1001 = vadd.f32 %v999, 1e-05
  %v1002 = vadd.f32 %v1000, 1e-05
  %v1003 = vrsqrt.pop %v1001
  %v1004 = vrsqrt.pop %v1002
  %v1005 = vmul.f32 %v989, %v1003
  %v1006 = vmul.f32 %v990, %v1004
  %v1007 = vlaneseq
  %v1008 = vshrl.u32 %v1007, 7
  %v1009 = vsub.s32 0, %v1008
  %v1010 = vrot.slane %v230, %v1009
  %v1011 = vmul.f32 %v1005, %v1010
  %v1012 = vmul.f32 %v1006, %v1010
  %v1013 = vlaneseq
  %v1014 = vshrl.u32 %v1013, 7
  %v1015 = vsub.s32 0, %v1014
  %v1016 = vrot.slane %v231, %v1015
  %v1017 = vadd.f32 %v1011, %v1016
  %v1018 = vadd.f32 %v1012, %v1016
  %v1019 = vpack.c.bf16 %v1018, %v1017
  %s1020 = smul.u32 4, 4
  %s1021 = smul.u32 %s1020, 8
  %s1022 = sshll.u32 %s1021, 4
  %1023 = dma.done [#allocation4], %s1022
  %v1024 = vld [vmem:[#allocation2] sm:$0xff]
  %v1025 = vld [vmem:[#allocation2 + $0x8] sm:$0xff]
  %v1026 = vld [vmem:[#allocation2 + $0x10] sm:$0xff]
  %v1027 = vld [vmem:[#allocation2 + $0x18] sm:$0xff]
  %v1028 = vld [vmem:[#allocation2 + $0x20] sm:$0xff]
  %v1029 = vld [vmem:[#allocation2 + $0x28] sm:$0xff]
  %v1030 = vld [vmem:[#allocation2 + $0x30] sm:$0xff]
  %v1031 = vld [vmem:[#allocation2 + $0x38] sm:$0xff]
  %v1032 = vld [vmem:[#allocation2 + $0x40] sm:$0xff]
  %v1033 = vld [vmem:[#allocation2 + $0x48] sm:$0xff]
  %v1034 = vld [vmem:[#allocation2 + $0x50] sm:$0xff]
  %v1035 = vld [vmem:[#allocation2 + $0x58] sm:$0xff]
  %v1036 = vld [vmem:[#allocation2 + $0x60] sm:$0xff]
  %v1037 = vld [vmem:[#allocation2 + $0x68] sm:$0xff]
  %v1038 = vld [vmem:[#allocation2 + $0x70] sm:$0xff]
  %v1039 = vld [vmem:[#allocation2 + $0x78] sm:$0xff]
  %v1040 = vld [vmem:[%s6] sm:$0xff]
  %v1042 = vlaneseq
  %v1043 = vshrl.u32 %v1042, 7
  %v1044 = vsub.s32 0, %v1043
  %v1045 = vrot.slane %v1040, %v1044
  %v1046 = vlaneseq
  %v1047 = vshrl.u32 %v1046, 7
  %v1048 = vsub.s32 1, %v1047
  %v1049 = vrot.slane %v1040, %v1048
  %v1050 = vlaneseq
  %v1051 = vshrl.u32 %v1050, 7
  %v1052 = vsub.s32 2, %v1051
  %v1053 = vrot.slane %v1040, %v1052
  %v1054 = vlaneseq
  %v1055 = vshrl.u32 %v1054, 7
  %v1056 = vsub.s32 3, %v1055
  %v1057 = vrot.slane %v1040, %v1056
  %v1058 = vlaneseq
  %v1059 = vshrl.u32 %v1058, 7
  %v1060 = vsub.s32 4, %v1059
  %v1061 = vrot.slane %v1040, %v1060
  %v1062 = vlaneseq
  %v1063 = vshrl.u32 %v1062, 7
  %v1064 = vsub.s32 5, %v1063
  %v1065 = vrot.slane %v1040, %v1064
  %v1066 = vlaneseq
  %v1067 = vshrl.u32 %v1066, 7
  %v1068 = vsub.s32 6, %v1067
  %v1069 = vrot.slane %v1040, %v1068
  %v1070 = vlaneseq
  %v1071 = vshrl.u32 %v1070, 7
  %v1072 = vsub.s32 7, %v1071
  %v1073 = vrot.slane %v1040, %v1072
  %v1083 = vsel %vm240, %v1019, 0
  %1085 = vmatprep.subr.bf16.mxu0 %v1025
  %1086 = vmatpush1.bf16.msra.mxu0 %v1024
  %1087 = vmatprep.subr.bf16.mxu0 %v1033
  %1088 = vmatpush1.bf16.msra.mxu0 %v1032
  %1089 = vmatprep.subr.bf16.mxu0 0
  %1090 = vmatpush1.bf16.msra.mxu0 0
  %1091 = vmatprep.subr.bf16.mxu0 0
  %1092 = vmatpush1.bf16.msra.mxu0 0
  %1093 = vmatprep.subr.bf16.mxu0 0
  %1094 = vmatpush1.bf16.msra.mxu0 0
  %1095 = vmatprep.subr.bf16.mxu0 0
  %1096 = vmatpush1.bf16.msra.mxu0 0
  %1097 = vmatprep.subr.bf16.mxu0 0
  %1098 = vmatpush1.bf16.msra.mxu0 0
  %1099 = vmatprep.subr.bf16.mxu0 0
  %1100 = vmatpush1.bf16.msra.mxu0 0
  %1101 = vmatprep.subr.bf16.mxu0 0
  %1102 = vmatpush1.bf16.msra.mxu0 0
  %1103 = vmatprep.subr.bf16.mxu0 0
  %1104 = vmatpush1.bf16.msra.mxu0 0
  %1105 = vmatprep.subr.bf16.mxu0 0
  %1106 = vmatpush1.bf16.msra.mxu0 0
  %1107 = vmatprep.subr.bf16.mxu0 0
  %1108 = vmatpush1.bf16.msra.mxu0 0
  %1109 = vmatprep.subr.bf16.mxu0 0
  %1110 = vmatpush1.bf16.msra.mxu0 0
  %1111 = vmatprep.subr.bf16.mxu0 0
  %1112 = vmatpush1.bf16.msra.mxu0 0
  %1113 = vmatprep.subr.bf16.mxu0 0
  %1114 = vmatpush1.bf16.msra.mxu0 0
  %1115 = vmatprep.subr.bf16.mxu0 0
  %1116 = vmatpush1.bf16.msra.mxu0 0
  %1117 = vmatprep.mubr.bf16.mxu0 0
  %1118 = vmatmul.mubr.bf16.gmra.mrb[0].mxu0 %v1083
  %v1119 = vpop.f32.mrb[0].mxu0
  %v1120 = vadd.f32 %v1045, %v1119
  %v1121 = vpop.f32.mrb[0].mxu0
  %v1122 = vadd.f32 %v1049, %v1121
  %v1123 = vpop.f32.mrb[0].mxu0
  %v1124 = vadd.f32 %v1045, %v1123
  %v1125 = vpop.f32.mrb[0].mxu0
  %v1126 = vadd.f32 %v1049, %v1125
  %1127 = vdwg.mxu0
  %1128 = vmatprep.subr.bf16.mxu0 %v1027
  %1129 = vmatpush1.bf16.msra.mxu0 %v1026
  %1130 = vmatprep.subr.bf16.mxu0 %v1035
  %1131 = vmatpush1.bf16.msra.mxu0 %v1034
  %1132 = vmatprep.subr.bf16.mxu0 0
  %1133 = vmatpush1.bf16.msra.mxu0 0
  %1134 = vmatprep.subr.bf16.mxu0 0
  %1135 = vmatpush1.bf16.msra.mxu0 0
  %1136 = vmatprep.subr.bf16.mxu0 0
  %1137 = vmatpush1.bf16.msra.mxu0 0
  %1138 = vmatprep.subr.bf16.mxu0 0
  %1139 = vmatpush1.bf16.msra.mxu0 0
  %1140 = vmatprep.subr.bf16.mxu0 0
  %1141 = vmatpush1.bf16.msra.mxu0 0
  %1142 = vmatprep.subr.bf16.mxu0 0
  %1143 = vmatpush1.bf16.msra.mxu0 0
  %1144 = vmatprep.subr.bf16.mxu0 0
  %1145 = vmatpush1.bf16.msra.mxu0 0
  %1146 = vmatprep.subr.bf16.mxu0 0
  %1147 = vmatpush1.bf16.msra.mxu0 0
  %1148 = vmatprep.subr.bf16.mxu0 0
  %1149 = vmatpush1.bf16.msra.mxu0 0
  %1150 = vmatprep.subr.bf16.mxu0 0
  %1151 = vmatpush1.bf16.msra.mxu0 0
  %1152 = vmatprep.subr.bf16.mxu0 0
  %1153 = vmatpush1.bf16.msra.mxu0 0
  %1154 = vmatprep.subr.bf16.mxu0 0
  %1155 = vmatpush1.bf16.msra.mxu0 0
  %1156 = vmatprep.subr.bf16.mxu0 0
  %1157 = vmatpush1.bf16.msra.mxu0 0
  %1158 = vmatprep.subr.bf16.mxu0 0
  %1159 = vmatpush1.bf16.msra.mxu0 0
  %1160 = vmatprep.mubr.bf16.mxu0 0
  %1161 = vmatmul.mubr.bf16.gmra.mrb[0].mxu0 %v1083
  %v1162 = vpop.f32.mrb[0].mxu0
  %v1163 = vadd.f32 %v1053, %v1162
  %v1164 = vpop.f32.mrb[0].mxu0
  %v1165 = vadd.f32 %v1057, %v1164
  %v1166 = vpop.f32.mrb[0].mxu0
  %v1167 = vadd.f32 %v1053, %v1166
  %v1168 = vpop.f32.mrb[0].mxu0
  %v1169 = vadd.f32 %v1057, %v1168
  %1170 = vdwg.mxu0
  %1171 = vmatprep.subr.bf16.mxu0 %v1029
  %1172 = vmatpush1.bf16.msra.mxu0 %v1028
  %1173 = vmatprep.subr.bf16.mxu0 %v1037
  %1174 = vmatpush1.bf16.msra.mxu0 %v1036
  %1175 = vmatprep.subr.bf16.mxu0 0
  %1176 = vmatpush1.bf16.msra.mxu0 0
  %1177 = vmatprep.subr.bf16.mxu0 0
  %1178 = vmatpush1.bf16.msra.mxu0 0
  %1179 = vmatprep.subr.bf16.mxu0 0
  %1180 = vmatpush1.bf16.msra.mxu0 0
  %1181 = vmatprep.subr.bf16.mxu0 0
  %1182 = vmatpush1.bf16.msra.mxu0 0
  %1183 = vmatprep.subr.bf16.mxu0 0
  %1184 = vmatpush1.bf16.msra.mxu0 0
  %1185 = vmatprep.subr.bf16.mxu0 0
  %1186 = vmatpush1.bf16.msra.mxu0 0
  %1187 = vmatprep.subr.bf16.mxu0 0
  %1188 = vmatpush1.bf16.msra.mxu0 0
  %1189 = vmatprep.subr.bf16.mxu0 0
  %1190 = vmatpush1.bf16.msra.mxu0 0
  %1191 = vmatprep.subr.bf16.mxu0 0
  %1192 = vmatpush1.bf16.msra.mxu0 0
  %1193 = vmatprep.subr.bf16.mxu0 0
  %1194 = vmatpush1.bf16.msra.mxu0 0
  %1195 = vmatprep.subr.bf16.mxu0 0
  %1196 = vmatpush1.bf16.msra.mxu0 0
  %1197 = vmatprep.subr.bf16.mxu0 0
  %1198 = vmatpush1.bf16.msra.mxu0 0
  %1199 = vmatprep.subr.bf16.mxu0 0
  %1200 = vmatpush1.bf16.msra.mxu0 0
  %1201 = vmatprep.subr.bf16.mxu0 0
  %1202 = vmatpush1.bf16.msra.mxu0 0
  %1203 = vmatprep.mubr.bf16.mxu0 0
  %1204 = vmatmul.mubr.bf16.gmra.mrb[0].mxu0 %v1083
  %v1205 = vpop.f32.mrb[0].mxu0
  %v1206 = vadd.f32 %v1061, %v1205
  %v1207 = vpop.f32.mrb[0].mxu0
  %v1208 = vadd.f32 %v1065, %v1207
  %v1209 = vpop.f32.mrb[0].mxu0
  %v1210 = vadd.f32 %v1061, %v1209
  %v1211 = vpop.f32.mrb[0].mxu0
  %v1212 = vadd.f32 %v1065, %v1211
  %1213 = vdwg.mxu0
  %1214 = vmatprep.subr.bf16.mxu0 %v1031
  %1215 = vmatpush1.bf16.msra.mxu0 %v1030
  %1216 = vmatprep.subr.bf16.mxu0 %v1039
  %1217 = vmatpush1.bf16.msra.mxu0 %v1038
  %1218 = vmatprep.subr.bf16.mxu0 0
  %1219 = vmatpush1.bf16.msra.mxu0 0
  %1220 = vmatprep.subr.bf16.mxu0 0
  %1221 = vmatpush1.bf16.msra.mxu0 0
  %1222 = vmatprep.subr.bf16.mxu0 0
  %1223 = vmatpush1.bf16.msra.mxu0 0
  %1224 = vmatprep.subr.bf16.mxu0 0
  %1225 = vmatpush1.bf16.msra.mxu0 0
  %1226 = vmatprep.subr.bf16.mxu0 0
  %1227 = vmatpush1.bf16.msra.mxu0 0
  %1228 = vmatprep.subr.bf16.mxu0 0
  %1229 = vmatpush1.bf16.msra.mxu0 0
  %1230 = vmatprep.subr.bf16.mxu0 0
  %1231 = vmatpush1.bf16.msra.mxu0 0
  %1232 = vmatprep.subr.bf16.mxu0 0
  %1233 = vmatpush1.bf16.msra.mxu0 0
  %1234 = vmatprep.subr.bf16.mxu0 0
  %1235 = vmatpush1.bf16.msra.mxu0 0
  %1236 = vmatprep.subr.bf16.mxu0 0
  %1237 = vmatpush1.bf16.msra.mxu0 0
  %1238 = vmatprep.subr.bf16.mxu0 0
  %1239 = vmatpush1.bf16.msra.mxu0 0
  %1240 = vmatprep.subr.bf16.mxu0 0
  %1241 = vmatpush1.bf16.msra.mxu0 0
  %1242 = vmatprep.subr.bf16.mxu0 0
  %1243 = vmatpush1.bf16.msra.mxu0 0
  %1244 = vmatprep.subr.bf16.mxu0 0
  %1245 = vmatpush1.bf16.msra.mxu0 0
  %1246 = vmatprep.mubr.bf16.mxu0 0
  %1247 = vmatmul.mubr.bf16.gmra.mrb[0].mxu0 %v1083
  %v1248 = vpop.f32.mrb[0].mxu0
  %v1249 = vadd.f32 %v1069, %v1248
  %v1250 = vpop.f32.mrb[0].mxu0
  %v1251 = vadd.f32 %v1073, %v1250
  %v1252 = vpop.f32.mrb[0].mxu0
  %v1253 = vadd.f32 %v1069, %v1252
  %v1254 = vpop.f32.mrb[0].mxu0
  %v1255 = vadd.f32 %v1073, %v1254
  %1256 = vdwg.mxu0
  %v1257 = vmax.f32 %v1120, 0.0
  %v1258 = vmax.f32 %v1122, 0.0
  %v1259 = vmax.f32 %v1163, 0.0
  %v1260 = vmax.f32 %v1165, 0.0
  %v1261 = vmax.f32 %v1206, 0.0
  %v1262 = vmax.f32 %v1208, 0.0
  %v1263 = vmax.f32 %v1249, 0.0
  %v1264 = vmax.f32 %v1251, 0.0
  %v1265 = vmax.f32 %v1124, 0.0
  %v1266 = vmax.f32 %v1126, 0.0
  %v1267 = vmax.f32 %v1167, 0.0
  %v1268 = vmax.f32 %v1169, 0.0
  %v1269 = vmax.f32 %v1210, 0.0
  %v1270 = vmax.f32 %v1212, 0.0
  %v1271 = vmax.f32 %v1253, 0.0
  %v1272 = vmax.f32 %v1255, 0.0
  %s1273 = smul.u32 4, 128
  %s1274 = smul.u32 %s1273, 1
  %s1275 = sshll.u32 %s1274, 4
  %1276 = dma.done %s208, %s1275
  %v1277 = vld [vmem:[%s7] sm:$0x1]
  %v1278 = vld [vmem:[%s7 + $0x1] sm:$0xff]
  %v1279 = vld [vmem:[%s7 + $0x9] sm:$0xff]
  %v1280 = vld [vmem:[%s7 + $0x11] sm:$0xff]
  %v1281 = vld [vmem:[%s7 + $0x19] sm:$0xff]
  %v1282 = vpack.c.bf16 %v1265, %v1257
  %v1283 = vpack.c.bf16 %v1266, %v1258
  %v1284 = vpack.c.bf16 %v1267, %v1259
  %v1285 = vpack.c.bf16 %v1268, %v1260
  %v1286 = vpack.c.bf16 %v1269, %v1261
  %v1287 = vpack.c.bf16 %v1270, %v1262
  %v1288 = vpack.c.bf16 %v1271, %v1263
  %v1289 = vpack.c.bf16 %v1272, %v1264
  %v1290 = vld [vmem:[#allocation3] sm:$0xff]
  %v1291 = vld [vmem:[#allocation3 + $0x8] sm:$0xff]
  %v1292 = vld [vmem:[#allocation3 + $0x10] sm:$0xff]
  %v1293 = vld [vmem:[#allocation3 + $0x18] sm:$0xff]
  %v1294 = vld [vmem:[#allocation3 + $0x20] sm:$0xff]
  %v1295 = vld [vmem:[#allocation3 + $0x28] sm:$0xff]
  %v1296 = vld [vmem:[#allocation3 + $0x30] sm:$0xff]
  %v1297 = vld [vmem:[#allocation3 + $0x38] sm:$0xff]
  %v1298 = vld [vmem:[#allocation3 + $0x40] sm:$0xff]
  %v1299 = vld [vmem:[#allocation3 + $0x48] sm:$0xff]
  %v1300 = vld [vmem:[#allocation3 + $0x50] sm:$0xff]
  %v1301 = vld [vmem:[#allocation3 + $0x58] sm:$0xff]
  %v1302 = vld [vmem:[#allocation3 + $0x60] sm:$0xff]
  %v1303 = vld [vmem:[#allocation3 + $0x68] sm:$0xff]
  %v1304 = vld [vmem:[#allocation3 + $0x70] sm:$0xff]
  %v1305 = vld [vmem:[#allocation3 + $0x78] sm:$0xff]
  %v1306 = vld [vmem:[#allocation3 + $0x80] sm:$0xff]
  %v1307 = vld [vmem:[#allocation3 + $0x88] sm:$0xff]
  %v1308 = vld [vmem:[#allocation3 + $0x90] sm:$0xff]
  %v1309 = vld [vmem:[#allocation3 + $0x98] sm:$0xff]
  %v1310 = vld [vmem:[#allocation3 + $0xa0] sm:$0xff]
  %v1311 = vld [vmem:[#allocation3 + $0xa8] sm:$0xff]
  %v1312 = vld [vmem:[#allocation3 + $0xb0] sm:$0xff]
  %v1313 = vld [vmem:[#allocation3 + $0xb8] sm:$0xff]
  %v1314 = vld [vmem:[#allocation3 + $0xc0] sm:$0xff]
  %v1315 = vld [vmem:[#allocation3 + $0xc8] sm:$0xff]
  %v1316 = vld [vmem:[#allocation3 + $0xd0] sm:$0xff]
  %v1317 = vld [vmem:[#allocation3 + $0xd8] sm:$0xff]
  %v1318 = vld [vmem:[#allocation3 + $0xe0] sm:$0xff]
  %v1319 = vld [vmem:[#allocation3 + $0xe8] sm:$0xff]
  %v1320 = vld [vmem:[#allocation3 + $0xf0] sm:$0xff]
  %v1321 = vld [vmem:[#allocation3 + $0xf8] sm:$0xff]
  %v1322 = vld [vmem:[#allocation3 + $0x100] sm:$0xff]
  %v1323 = vld [vmem:[#allocation3 + $0x108] sm:$0xff]
  %v1324 = vld [vmem:[#allocation3 + $0x110] sm:$0xff]
  %v1325 = vld [vmem:[#allocation3 + $0x118] sm:$0xff]
  %v1326 = vld [vmem:[#allocation3 + $0x120] sm:$0xff]
  %v1327 = vld [vmem:[#allocation3 + $0x128] sm:$0xff]
  %v1328 = vld [vmem:[#allocation3 + $0x130] sm:$0xff]
  %v1329 = vld [vmem:[#allocation3 + $0x138] sm:$0xff]
  %v1330 = vld [vmem:[#allocation3 + $0x140] sm:$0xff]
  %v1331 = vld [vmem:[#allocation3 + $0x148] sm:$0xff]
  %v1332 = vld [vmem:[#allocation3 + $0x150] sm:$0xff]
  %v1333 = vld [vmem:[#allocation3 + $0x158] sm:$0xff]
  %v1334 = vld [vmem:[#allocation3 + $0x160] sm:$0xff]
  %v1335 = vld [vmem:[#allocation3 + $0x168] sm:$0xff]
  %v1336 = vld [vmem:[#allocation3 + $0x170] sm:$0xff]
  %v1337 = vld [vmem:[#allocation3 + $0x178] sm:$0xff]
  %v1338 = vld [vmem:[#allocation3 + $0x180] sm:$0xff]
  %v1339 = vld [vmem:[#allocation3 + $0x188] sm:$0xff]
  %v1340 = vld [vmem:[#allocation3 + $0x190] sm:$0xff]
  %v1341 = vld [vmem:[#allocation3 + $0x198] sm:$0xff]
  %v1342 = vld [vmem:[#allocation3 + $0x1a0] sm:$0xff]
  %v1343 = vld [vmem:[#allocation3 + $0x1a8] sm:$0xff]
  %v1344 = vld [vmem:[#allocation3 + $0x1b0] sm:$0xff]
  %v1345 = vld [vmem:[#allocation3 + $0x1b8] sm:$0xff]
  %v1346 = vld [vmem:[#allocation3 + $0x1c0] sm:$0xff]
  %v1347 = vld [vmem:[#allocation3 + $0x1c8] sm:$0xff]
  %v1348 = vld [vmem:[#allocation3 + $0x1d0] sm:$0xff]
  %v1349 = vld [vmem:[#allocation3 + $0x1d8] sm:$0xff]
  %v1350 = vld [vmem:[#allocation3 + $0x1e0] sm:$0xff]
  %v1351 = vld [vmem:[#allocation3 + $0x1e8] sm:$0xff]
  %v1352 = vld [vmem:[#allocation3 + $0x1f0] sm:$0xff]
  %v1353 = vld [vmem:[#allocation3 + $0x1f8] sm:$0xff]
  %v1355 = vsel %vm240, %v1017, 0
  %v1358 = vsel %vm240, %v1018, 0
  %1360 = vmatprep.subr.mxu0 0.0
  %1361 = vmatpush1.msra.mxu0 %v1278
  %1362 = vmatprep.subr.mxu0 0.0
  %1363 = vmatpush1.msra.mxu0 %v1279
  %1364 = vmatprep.subr.mxu0 0.0
  %1365 = vmatpush1.msra.mxu0 %v1280
  %1366 = vmatprep.subr.mxu0 0.0
  %1367 = vmatpush1.msra.mxu0 %v1281
  %1368 = vmatprep.subr.mxu0 0.0
  %1369 = vmatpush1.msra.mxu0 0.0
  %1370 = vmatprep.subr.mxu0 0.0
  %1371 = vmatpush1.msra.mxu0 0.0
  %1372 = vmatprep.subr.mxu0 0.0
  %1373 = vmatpush1.msra.mxu0 0.0
  %1374 = vmatprep.subr.mxu0 0.0
  %1375 = vmatpush1.msra.mxu0 0.0
  %1376 = vmatprep.subr.mxu0 0.0
  %1377 = vmatpush1.msra.mxu0 0.0
  %1378 = vmatprep.subr.mxu0 0.0
  %1379 = vmatpush1.msra.mxu0 0.0
  %1380 = vmatprep.subr.mxu0 0.0
  %1381 = vmatpush1.msra.mxu0 0.0
  %1382 = vmatprep.subr.mxu0 0.0
  %1383 = vmatpush1.msra.mxu0 0.0
  %1384 = vmatprep.subr.mxu0 0.0
  %1385 = vmatpush1.msra.mxu0 0.0
  %1386 = vmatprep.subr.mxu0 0.0
  %1387 = vmatpush1.msra.mxu0 0.0
  %1388 = vmatprep.subr.mxu0 0.0
  %1389 = vmatpush1.msra.mxu0 0.0
  %1390 = vmatprep.subr.mxu0 0.0
  %1391 = vmatpush1.msra.mxu0 0.0
  %1392 = vmatprep.subr.mxu0 0.0
  %1393 = vmatpush1.msra.mxu0 0.0
  %1394 = vmatprep.subr.mxu0 0.0
  %1395 = vmatpush1.msra.mxu0 0.0
  %1396 = vmatprep.subr.mxu0 0.0
  %1397 = vmatpush1.msra.mxu0 0.0
  %1398 = vmatprep.subr.mxu0 0.0
  %1399 = vmatpush1.msra.mxu0 0.0
  %1400 = vmatprep.subr.mxu0 0.0
  %1401 = vmatpush1.msra.mxu0 0.0
  %1402 = vmatprep.subr.mxu0 0.0
  %1403 = vmatpush1.msra.mxu0 0.0
  %1404 = vmatprep.subr.mxu0 0.0
  %1405 = vmatpush1.msra.mxu0 0.0
  %1406 = vmatprep.subr.mxu0 0.0
  %1407 = vmatpush1.msra.mxu0 0.0
  %1408 = vmatprep.subr.mxu0 0.0
  %1409 = vmatpush1.msra.mxu0 0.0
  %1410 = vmatprep.subr.mxu0 0.0
  %1411 = vmatpush1.msra.mxu0 0.0
  %1412 = vmatprep.subr.mxu0 0.0
  %1413 = vmatpush1.msra.mxu0 0.0
  %1414 = vmatprep.subr.mxu0 0.0
  %1415 = vmatpush1.msra.mxu0 0.0
  %1416 = vmatprep.subr.mxu0 0.0
  %1417 = vmatpush1.msra.mxu0 0.0
  %1418 = vmatprep.subr.mxu0 0.0
  %1419 = vmatpush1.msra.mxu0 0.0
  %1420 = vmatprep.subr.mxu0 0.0
  %1421 = vmatpush1.msra.mxu0 0.0
  %1422 = vmatprep.subr.mxu0 0.0
  %1423 = vmatpush1.msra.mxu0 0.0
  %1424 = vmatprep.mubr.f32.mxu0 0.0
  %1425 = vmatmul.mubr.f32.gmra.mrb[0].mxu0 %v1355
  %v1426 = vpop.f32.mrb[0].mxu0
  %v1427 = vadd.f32 0.0, %v1426
  %v1428 = vpop.f32.mrb[0].mxu0
  %1429 = vmatprep.mubr.f32.mxu0 0.0
  %1430 = vmatmul.mubr.f32.gmra.mrb[0].mxu0 %v1358
  %v1431 = vpop.f32.mrb[0].mxu0
  %v1432 = vadd.f32 0.0, %v1431
  %v1433 = vpop.f32.mrb[0].mxu0
  %1434 = vdwg.mxu0
  %1435 = vmatprep.subr.bf16.mxu0 0
  %1436 = vmatpush1.bf16.msra.mxu0 %v1290
  %1437 = vmatprep.subr.bf16.mxu0 0
  %1438 = vmatpush1.bf16.msra.mxu0 %v1291
  %1439 = vmatprep.subr.bf16.mxu0 0
  %1440 = vmatpush1.bf16.msra.mxu0 %v1292
  %1441 = vmatprep.subr.bf16.mxu0 0
  %1442 = vmatpush1.bf16.msra.mxu0 %v1293
  %1443 = vmatprep.subr.bf16.mxu0 0
  %1444 = vmatpush1.bf16.msra.mxu0 %v1294
  %1445 = vmatprep.subr.bf16.mxu0 0
  %1446 = vmatpush1.bf16.msra.mxu0 %v1295
  %1447 = vmatprep.subr.bf16.mxu0 0
  %1448 = vmatpush1.bf16.msra.mxu0 %v1296
  %1449 = vmatprep.subr.bf16.mxu0 0
  %1450 = vmatpush1.bf16.msra.mxu0 %v1297
  %1451 = vmatprep.subr.bf16.mxu0 0
  %1452 = vmatpush1.bf16.msra.mxu0 %v1298
  %1453 = vmatprep.subr.bf16.mxu0 0
  %1454 = vmatpush1.bf16.msra.mxu0 %v1299
  %1455 = vmatprep.subr.bf16.mxu0 0
  %1456 = vmatpush1.bf16.msra.mxu0 %v1300
  %1457 = vmatprep.subr.bf16.mxu0 0
  %1458 = vmatpush1.bf16.msra.mxu0 %v1301
  %1459 = vmatprep.subr.bf16.mxu0 0
  %1460 = vmatpush1.bf16.msra.mxu0 %v1302
  %1461 = vmatprep.subr.bf16.mxu0 0
  %1462 = vmatpush1.bf16.msra.mxu0 %v1303
  %1463 = vmatprep.subr.bf16.mxu0 0
  %1464 = vmatpush1.bf16.msra.mxu0 %v1304
  %1465 = vmatprep.subr.bf16.mxu0 0
  %1466 = vmatpush1.bf16.msra.mxu0 %v1305
  %1467 = vmatprep.mubr.bf16.mxu0 %v1283
  %1468 = vmatmul.mubr.bf16.gmra.mrb[0].mxu0 %v1282
  %v1469 = vpop.f32.mrb[0].mxu0
  %v1470 = vadd.f32 %v1427, %v1469
  %v1471 = vpop.f32.mrb[0].mxu0
  %v1472 = vpop.f32.mrb[0].mxu0
  %v1473 = vadd.f32 %v1432, %v1472
  %v1474 = vpop.f32.mrb[0].mxu0
  %1475 = vdwg.mxu0
  %1476 = vmatprep.subr.bf16.mxu0 0
  %1477 = vmatpush1.bf16.msra.mxu0 %v1306
  %1478 = vmatprep.subr.bf16.mxu0 0
  %1479 = vmatpush1.bf16.msra.mxu0 %v1307
  %1480 = vmatprep.subr.bf16.mxu0 0
  %1481 = vmatpush1.bf16.msra.mxu0 %v1308
  %1482 = vmatprep.subr.bf16.mxu0 0
  %1483 = vmatpush1.bf16.msra.mxu0 %v1309
  %1484 = vmatprep.subr.bf16.mxu0 0
  %1485 = vmatpush1.bf16.msra.mxu0 %v1310
  %1486 = vmatprep.subr.bf16.mxu0 0
  %1487 = vmatpush1.bf16.msra.mxu0 %v1311
  %1488 = vmatprep.subr.bf16.mxu0 0
  %1489 = vmatpush1.bf16.msra.mxu0 %v1312
  %1490 = vmatprep.subr.bf16.mxu0 0
  %1491 = vmatpush1.bf16.msra.mxu0 %v1313
  %1492 = vmatprep.subr.bf16.mxu0 0
  %1493 = vmatpush1.bf16.msra.mxu0 %v1314
  %1494 = vmatprep.subr.bf16.mxu0 0
  %1495 = vmatpush1.bf16.msra.mxu0 %v1315
  %1496 = vmatprep.subr.bf16.mxu0 0
  %1497 = vmatpush1.bf16.msra.mxu0 %v1316
  %1498 = vmatprep.subr.bf16.mxu0 0
  %1499 = vmatpush1.bf16.msra.mxu0 %v1317
  %1500 = vmatprep.subr.bf16.mxu0 0
  %1501 = vmatpush1.bf16.msra.mxu0 %v1318
  %1502 = vmatprep.subr.bf16.mxu0 0
  %1503 = vmatpush1.bf16.msra.mxu0 %v1319
  %1504 = vmatprep.subr.bf16.mxu0 0
  %1505 = vmatpush1.bf16.msra.mxu0 %v1320
  %1506 = vmatprep.subr.bf16.mxu0 0
  %1507 = vmatpush1.bf16.msra.mxu0 %v1321
  %1508 = vmatprep.mubr.bf16.mxu0 %v1285
  %1509 = vmatmul.mubr.bf16.gmra.mrb[0].mxu0 %v1284
  %v1510 = vpop.f32.mrb[0].mxu0
  %v1511 = vadd.f32 %v1470, %v1510
  %v1512 = vpop.f32.mrb[0].mxu0
  %v1513 = vpop.f32.mrb[0].mxu0
  %v1514 = vadd.f32 %v1473, %v1513
  %v1515 = vpop.f32.mrb[0].mxu0
  %1516 = vdwg.mxu0
  %1517 = vmatprep.subr.bf16.mxu0 0
  %1518 = vmatpush1.bf16.msra.mxu0 %v1322
  %1519 = vmatprep.subr.bf16.mxu0 0
  %1520 = vmatpush1.bf16.msra.mxu0 %v1323
  %1521 = vmatprep.subr.bf16.mxu0 0
  %1522 = vmatpush1.bf16.msra.mxu0 %v1324
  %1523 = vmatprep.subr.bf16.mxu0 0
  %1524 = vmatpush1.bf16.msra.mxu0 %v1325
  %1525 = vmatprep.subr.bf16.mxu0 0
  %1526 = vmatpush1.bf16.msra.mxu0 %v1326
  %1527 = vmatprep.subr.bf16.mxu0 0
  %1528 = vmatpush1.bf16.msra.mxu0 %v1327
  %1529 = vmatprep.subr.bf16.mxu0 0
  %1530 = vmatpush1.bf16.msra.mxu0 %v1328
  %1531 = vmatprep.subr.bf16.mxu0 0
  %1532 = vmatpush1.bf16.msra.mxu0 %v1329
  %1533 = vmatprep.subr.bf16.mxu0 0
  %1534 = vmatpush1.bf16.msra.mxu0 %v1330
  %1535 = vmatprep.subr.bf16.mxu0 0
  %1536 = vmatpush1.bf16.msra.mxu0 %v1331
  %1537 = vmatprep.subr.bf16.mxu0 0
  %1538 = vmatpush1.bf16.msra.mxu0 %v1332
  %1539 = vmatprep.subr.bf16.mxu0 0
  %1540 = vmatpush1.bf16.msra.mxu0 %v1333
  %1541 = vmatprep.subr.bf16.mxu0 0
  %1542 = vmatpush1.bf16.msra.mxu0 %v1334
  %1543 = vmatprep.subr.bf16.mxu0 0
  %1544 = vmatpush1.bf16.msra.mxu0 %v1335
  %1545 = vmatprep.subr.bf16.mxu0 0
  %1546 = vmatpush1.bf16.msra.mxu0 %v1336
  %1547 = vmatprep.subr.bf16.mxu0 0
  %1548 = vmatpush1.bf16.msra.mxu0 %v1337
  %1549 = vmatprep.mubr.bf16.mxu0 %v1287
  %1550 = vmatmul.mubr.bf16.gmra.mrb[0].mxu0 %v1286
  %v1551 = vpop.f32.mrb[0].mxu0
  %v1552 = vadd.f32 %v1511, %v1551
  %v1553 = vpop.f32.mrb[0].mxu0
  %v1554 = vpop.f32.mrb[0].mxu0
  %v1555 = vadd.f32 %v1514, %v1554
  %v1556 = vpop.f32.mrb[0].mxu0
  %1557 = vdwg.mxu0
  %1558 = vmatprep.subr.bf16.mxu0 0
  %1559 = vmatpush1.bf16.msra.mxu0 %v1338
  %1560 = vmatprep.subr.bf16.mxu0 0
  %1561 = vmatpush1.bf16.msra.mxu0 %v1339
  %1562 = vmatprep.subr.bf16.mxu0 0
  %1563 = vmatpush1.bf16.msra.mxu0 %v1340
  %1564 = vmatprep.subr.bf16.mxu0 0
  %1565 = vmatpush1.bf16.msra.mxu0 %v1341
  %1566 = vmatprep.subr.bf16.mxu0 0
  %1567 = vmatpush1.bf16.msra.mxu0 %v1342
  %1568 = vmatprep.subr.bf16.mxu0 0
  %1569 = vmatpush1.bf16.msra.mxu0 %v1343
  %1570 = vmatprep.subr.bf16.mxu0 0
  %1571 = vmatpush1.bf16.msra.mxu0 %v1344
  %1572 = vmatprep.subr.bf16.mxu0 0
  %1573 = vmatpush1.bf16.msra.mxu0 %v1345
  %1574 = vmatprep.subr.bf16.mxu0 0
  %1575 = vmatpush1.bf16.msra.mxu0 %v1346
  %1576 = vmatprep.subr.bf16.mxu0 0
  %1577 = vmatpush1.bf16.msra.mxu0 %v1347
  %1578 = vmatprep.subr.bf16.mxu0 0
  %1579 = vmatpush1.bf16.msra.mxu0 %v1348
  %1580 = vmatprep.subr.bf16.mxu0 0
  %1581 = vmatpush1.bf16.msra.mxu0 %v1349
  %1582 = vmatprep.subr.bf16.mxu0 0
  %1583 = vmatpush1.bf16.msra.mxu0 %v1350
  %1584 = vmatprep.subr.bf16.mxu0 0
  %1585 = vmatpush1.bf16.msra.mxu0 %v1351
  %1586 = vmatprep.subr.bf16.mxu0 0
  %1587 = vmatpush1.bf16.msra.mxu0 %v1352
  %1588 = vmatprep.subr.bf16.mxu0 0
  %1589 = vmatpush1.bf16.msra.mxu0 %v1353
  %1590 = vmatprep.mubr.bf16.mxu0 %v1289
  %1591 = vmatmul.mubr.bf16.gmra.mrb[0].mxu0 %v1288
  %v1592 = vpop.f32.mrb[0].mxu0
  %v1593 = vadd.f32 %v1552, %v1592
  %v1594 = vpop.f32.mrb[0].mxu0
  %v1595 = vpop.f32.mrb[0].mxu0
  %v1596 = vadd.f32 %v1555, %v1595
  %v1597 = vpop.f32.mrb[0].mxu0
  %1598 = vdwg.mxu0
  %v1599 = vlaneseq
  %v1600 = vshrl.u32 %v1599, 7
  %v1601 = vsub.s32 0, %v1600
  %v1602 = vrot.slane %v1277, %v1601
  %v1603 = vadd.f32 %v1593, %v1602
  %v1604 = vadd.f32 %v1596, %v1602
  %v1605 = vlaneseq
  %v1606 = vand.u32 %v1605, 127
  %vm1607 = vcmp.ge.s32.totalorder %v1606, 4
  %vm1608 = vcmp.lt.s32.totalorder %v1606, 10
  %vm1609 = vmand %vm1607, %vm1608
  %v1610 = vxor.u32 %v1603, 2147483648
  %v1611 = vxor.u32 %v1604, 2147483648
  %v1612 = vmul.f32 %v1610, 1.442695
  %v1613 = vpow.pop %v1612
  %v1614 = vmul.f32 %v1611, 1.442695
  %v1615 = vpow.pop %v1614
  %v1616 = vadd.f32 %v1613, 1.0
  %v1617 = vadd.f32 %v1615, 1.0
  %v1618 = vrcp.pop %v1616
  %v1619 = vmul.f32 1.0, %v1618
  %v1620 = vrcp.pop %v1617
  %v1621 = vmul.f32 1.0, %v1620
  %v1622 = vsel %vm1609, %v1619, %v1603
  %v1623 = vsel %vm1609, %v1621, %v1604
  %1624 = vst [vmem:[%s10] sm:$0xff] %v1622
  %1625 = vst [vmem:[%s10 + $0x8] sm:$0xff] %v1623
  // Predicated region
  $region75: #{forward.1} parent=0 // pred_check
    _
  $region76: #{forward.1} parent=0 // pred_check_branch
    %1627 = sbr.rel (0) target = $region78
  $region77: #{forward.1} parent=0 // pred_region
    _
  $region78: #{forward.1} parent=0 // pred_fallthru
    _
  // Predicated region
  $region79: #{forward.1} parent=0 // pred_check
    _
  $region80: #{forward.1} parent=0 // pred_check_branch
    %1629 = sbr.rel (0) target = $region82
  $region81: #{forward.1} parent=0 // pred_region
    _
  $region82: #{forward.1} parent=0 // pred_fallthru
    _
  %1630 = vsyncmov [#allocation4]
  %s1631 = vpop.sfrf %1630
  %p1632 = scmp.eq.s32.totalorder %s1631, 0
  %p1633 = pneg %p1632
  %1635 = shalt.err (%p1633)
  %s1636 = scalar_lea.sflag [#allocation4], 1
  %1637 = vsyncmov %s1636
  %s1638 = vpop.sfrf %1637
  %p1639 = scmp.eq.s32.totalorder %s1638, 0
  %p1640 = pneg %p1639
  %1642 = shalt.err (%p1640)

</llo_original>
